<compile_context>
chip_gen: v7x
topology: tpu7x:2x2x1
jax: 0.10.0
libtpu: 0.0.40
codegen_flags: <defaults>
</compile_context>

<pallas_src>
import functools

import jax
import jax.numpy as jnp
from jax.experimental import pallas as pl
from jax.experimental.pallas import tpu as pltpu


def _round_up(x: int, m: int) -> int:
    return ((x + m - 1) // m) * m


def _shifted_matmul_kernel(x_ref, w_ref, b_ref, o_ref, *, kH, kW, W_pad, out_cols):
    """One batch image per grid step.

    x_ref: (C, L_pad)        zero-padded image, flattened H_pad*W_pad on lanes
    w_ref: (kH*kW, Cout, C)  weight[:, :, kr, kc] slices
    b_ref: (Cout, 1)
    o_ref: (Cout, out_cols)  dense (stride-1) conv output on padded column grid
    """
    acc = None
    for idx in range(kH * kW):          # static, fully unrolled (kH*kW small)
        kr, kc = divmod(idx, kW)
        shift = kr * W_pad + kc
        xs = x_ref[:, pl.ds(shift, out_cols)]                 # (C, out_cols)
        part = jnp.dot(w_ref[idx], xs, preferred_element_type=jnp.float32)
        acc = part if acc is None else acc + part
    o_ref[...] = (acc + b_ref[...]).astype(o_ref.dtype)


def conv2d_pallas(x, weight, bias, stride, padding):
    N, C, H, W = x.shape
    Cout, Cin, kH, kW = weight.shape
    assert Cin == C
    sH, sW = stride
    p = padding
    H_pad, W_pad = H + 2 * p, W + 2 * p
    outH = (H_pad - kH) // sH + 1
    outW = (W_pad - kW) // sW + 1
    outH1 = H_pad - kH + 1                     # stride-1 rows computed in-kernel

    # Column counts, padded to full 128-lane vregs (lane-dense loads & stores).
    Lout_dense = outH1 * W_pad                 # valid dense-output columns
    out_cols = _round_up(Lout_dense, 128)      # output tile width (lanes)
    shift_max = (kH - 1) * W_pad + (kW - 1)
    L = H_pad * W_pad
    L_pad = _round_up(max(L, shift_max + out_cols), 128)   # no in-kernel OOB reads

    # Glue (all ~1x the input size — no 9x im2col, no big transposes).
    x_pad = jnp.pad(x, ((0, 0), (0, 0), (p, p), (p, p)))
    x_flat = x_pad.reshape(N, C, L)
    x_flat = jnp.pad(x_flat, ((0, 0), (0, 0), (0, L_pad - L)))

    # weight[co, c, kr, kc] -> w_r[kr*kW+kc, co, c]   (tiny)
    w_r = weight.transpose(2, 3, 0, 1).reshape(kH * kW, Cout, C).astype(jnp.float32)
    b_r = bias.reshape(Cout, 1).astype(jnp.float32)

    kernel = functools.partial(
        _shifted_matmul_kernel, kH=kH, kW=kW, W_pad=W_pad, out_cols=out_cols)

    out_flat = pl.pallas_call(
        kernel,
        out_shape=jax.ShapeDtypeStruct((N, Cout, out_cols), x.dtype),
        grid_spec=pltpu.PrefetchScalarGridSpec(
            num_scalar_prefetch=0,
            grid=(N,),
            in_specs=[
                pl.BlockSpec((None, C, L_pad), lambda n: (n, 0, 0)),
                pl.BlockSpec((kH * kW, Cout, C), lambda n: (0, 0, 0)),
                pl.BlockSpec((Cout, 1), lambda n: (0, 0)),
            ],
            out_specs=pl.BlockSpec((None, Cout, out_cols), lambda n: (n, 0, 0)),
        ),
        compiler_params=pltpu.CompilerParams(
            dimension_semantics=("parallel",),
            vmem_limit_bytes=32 * 1024 * 1024,
        ),
    )(x_flat, w_r, b_r)

    # Trim the padded column grid back to the requested (strided) output, NCHW.
    out = out_flat[:, :, :Lout_dense].reshape(N, Cout, outH1, W_pad)
    out = out[:, :, ::sH, ::sW][:, :, :outH, :outW]
    return out


if __name__ == "__main__":
    # module config: myConv2d(in_channels=4, out_channels=8, kernel_size=(3,3),
    #                         stride=(1,1), padding=1)
    in_channels, out_channels = 4, 8
    kernel_size = (3, 3)
    stride = (1, 1)
    padding = 1

    key = jax.random.PRNGKey(0)
    kx, kw, kb = jax.random.split(key, 3)
    x = jax.random.normal(kx, (2, in_channels, 16, 16), dtype=jnp.float32)
    weight = jax.random.normal(kw, (out_channels, in_channels) + kernel_size,
                               dtype=jnp.float32)
    bias = jax.random.normal(kb, (out_channels,), dtype=jnp.float32)

    y = conv2d_pallas(x, weight, bias, stride, padding)
    y = jax.block_until_ready(y)

    # reference check against XLA's conv
    ref = jax.lax.conv_general_dilated(
        x, weight, window_strides=stride,
        padding=[(padding, padding), (padding, padding)],
        dimension_numbers=("NCHW", "OIHW", "NCHW"),
    ) + bias.reshape(1, -1, 1, 1)

    assert y.shape == (2, out_channels, 16, 16), y.shape
    assert jnp.allclose(y, ref, atol=1e-4, rtol=1e-4)
    print("KERNEL_OK")
</pallas_src>

<mosaic_0001>
module attributes {stable_mosaic.version = 11 : i64} {
  func.func @_shifted_matmul_kernel(%arg0: i32, %arg1: memref<1x4x512xf32, #tpu.memory_space<vmem>>, %arg2: memref<9x8x4xf32, #tpu.memory_space<vmem>>, %arg3: memref<8x1xf32, #tpu.memory_space<vmem>>, %arg4: memref<1x8x384xf32, #tpu.memory_space<vmem>>) attributes {dimension_semantics = [#tpu.dimension_semantics<parallel>], iteration_bounds = array<i64: 2>, scalar_prefetch = 0 : i64, scratch_operands = 0 : i64, tpu.core_type = #tpu.core_type<tc>, window_params = [{transform_indices = @transform_0, window_bounds = array<i64: 1, 4, 512>}, {pipeline_mode = #tpu.pipeline_mode<synchronous>, transform_indices = @transform_1, window_bounds = array<i64: 9, 8, 4>}, {pipeline_mode = #tpu.pipeline_mode<synchronous>, transform_indices = @transform_2, window_bounds = array<i64: 8, 1>}, {transform_indices = @transform_3, window_bounds = array<i64: 1, 8, 384>}]} {
    %c0 = arith.constant 0 : index
    %c0_0 = arith.constant 0 : index
    %c0_1 = arith.constant 0 : index
    %0 = vector.load %arg1[%c0, %c0_0, %c0_1] : memref<1x4x512xf32, #tpu.memory_space<vmem>>, vector<1x4x384xf32>
    %1 = vector.shape_cast %0 : vector<1x4x384xf32> to vector<4x384xf32>
    %c0_2 = arith.constant 0 : index
    %c0_3 = arith.constant 0 : index
    %c0_4 = arith.constant 0 : index
    %2 = vector.load %arg2[%c0_2, %c0_3, %c0_4] : memref<9x8x4xf32, #tpu.memory_space<vmem>>, vector<1x8x4xf32>
    %3 = vector.shape_cast %2 : vector<1x8x4xf32> to vector<8x4xf32>
    %cst = arith.constant dense<0.000000e+00> : vector<8x384xf32>
    %4 = tpu.matmul %3, %1, %cst {dimension_numbers = #tpu.dot_dimension_numbers<[1], [0], [0], [1], [0, 0, 1, 1], [], []>} : vector<8x4xf32>, vector<4x384xf32>, vector<8x384xf32> -> vector<8x384xf32>
    %c0_5 = arith.constant 0 : index
    %c0_6 = arith.constant 0 : index
    %c1 = arith.constant 1 : index
    %5 = vector.load %arg1[%c0_5, %c0_6, %c1] : memref<1x4x512xf32, #tpu.memory_space<vmem>>, vector<1x4x384xf32>
    %6 = vector.shape_cast %5 : vector<1x4x384xf32> to vector<4x384xf32>
    %c1_7 = arith.constant 1 : index
    %c0_8 = arith.constant 0 : index
    %c0_9 = arith.constant 0 : index
    %7 = vector.load %arg2[%c1_7, %c0_8, %c0_9] : memref<9x8x4xf32, #tpu.memory_space<vmem>>, vector<1x8x4xf32>
    %8 = vector.shape_cast %7 : vector<1x8x4xf32> to vector<8x4xf32>
    %cst_10 = arith.constant dense<0.000000e+00> : vector<8x384xf32>
    %9 = tpu.matmul %8, %6, %cst_10 {dimension_numbers = #tpu.dot_dimension_numbers<[1], [0], [0], [1], [0, 0, 1, 1], [], []>} : vector<8x4xf32>, vector<4x384xf32>, vector<8x384xf32> -> vector<8x384xf32>
    %10 = arith.addf %4, %9 : vector<8x384xf32>
    %c0_11 = arith.constant 0 : index
    %c0_12 = arith.constant 0 : index
    %c2 = arith.constant 2 : index
    %11 = vector.load %arg1[%c0_11, %c0_12, %c2] : memref<1x4x512xf32, #tpu.memory_space<vmem>>, vector<1x4x384xf32>
    %12 = vector.shape_cast %11 : vector<1x4x384xf32> to vector<4x384xf32>
    %c2_13 = arith.constant 2 : index
    %c0_14 = arith.constant 0 : index
    %c0_15 = arith.constant 0 : index
    %13 = vector.load %arg2[%c2_13, %c0_14, %c0_15] : memref<9x8x4xf32, #tpu.memory_space<vmem>>, vector<1x8x4xf32>
    %14 = vector.shape_cast %13 : vector<1x8x4xf32> to vector<8x4xf32>
    %cst_16 = arith.constant dense<0.000000e+00> : vector<8x384xf32>
    %15 = tpu.matmul %14, %12, %cst_16 {dimension_numbers = #tpu.dot_dimension_numbers<[1], [0], [0], [1], [0, 0, 1, 1], [], []>} : vector<8x4xf32>, vector<4x384xf32>, vector<8x384xf32> -> vector<8x384xf32>
    %16 = arith.addf %10, %15 : vector<8x384xf32>
    %c0_17 = arith.constant 0 : index
    %c0_18 = arith.constant 0 : index
    %c18 = arith.constant 18 : index
    %17 = vector.load %arg1[%c0_17, %c0_18, %c18] : memref<1x4x512xf32, #tpu.memory_space<vmem>>, vector<1x4x384xf32>
    %18 = vector.shape_cast %17 : vector<1x4x384xf32> to vector<4x384xf32>
    %c3 = arith.constant 3 : index
    %c0_19 = arith.constant 0 : index
    %c0_20 = arith.constant 0 : index
    %19 = vector.load %arg2[%c3, %c0_19, %c0_20] : memref<9x8x4xf32, #tpu.memory_space<vmem>>, vector<1x8x4xf32>
    %20 = vector.shape_cast %19 : vector<1x8x4xf32> to vector<8x4xf32>
    %cst_21 = arith.constant dense<0.000000e+00> : vector<8x384xf32>
    %21 = tpu.matmul %20, %18, %cst_21 {dimension_numbers = #tpu.dot_dimension_numbers<[1], [0], [0], [1], [0, 0, 1, 1], [], []>} : vector<8x4xf32>, vector<4x384xf32>, vector<8x384xf32> -> vector<8x384xf32>
    %22 = arith.addf %16, %21 : vector<8x384xf32>
    %c0_22 = arith.constant 0 : index
    %c0_23 = arith.constant 0 : index
    %c19 = arith.constant 19 : index
    %23 = vector.load %arg1[%c0_22, %c0_23, %c19] : memref<1x4x512xf32, #tpu.memory_space<vmem>>, vector<1x4x384xf32>
    %24 = vector.shape_cast %23 : vector<1x4x384xf32> to vector<4x384xf32>
    %c4 = arith.constant 4 : index
    %c0_24 = arith.constant 0 : index
    %c0_25 = arith.constant 0 : index
    %25 = vector.load %arg2[%c4, %c0_24, %c0_25] : memref<9x8x4xf32, #tpu.memory_space<vmem>>, vector<1x8x4xf32>
    %26 = vector.shape_cast %25 : vector<1x8x4xf32> to vector<8x4xf32>
    %cst_26 = arith.constant dense<0.000000e+00> : vector<8x384xf32>
    %27 = tpu.matmul %26, %24, %cst_26 {dimension_numbers = #tpu.dot_dimension_numbers<[1], [0], [0], [1], [0, 0, 1, 1], [], []>} : vector<8x4xf32>, vector<4x384xf32>, vector<8x384xf32> -> vector<8x384xf32>
    %28 = arith.addf %22, %27 : vector<8x384xf32>
    %c0_27 = arith.constant 0 : index
    %c0_28 = arith.constant 0 : index
    %c20 = arith.constant 20 : index
    %29 = vector.load %arg1[%c0_27, %c0_28, %c20] : memref<1x4x512xf32, #tpu.memory_space<vmem>>, vector<1x4x384xf32>
    %30 = vector.shape_cast %29 : vector<1x4x384xf32> to vector<4x384xf32>
    %c5 = arith.constant 5 : index
    %c0_29 = arith.constant 0 : index
    %c0_30 = arith.constant 0 : index
    %31 = vector.load %arg2[%c5, %c0_29, %c0_30] : memref<9x8x4xf32, #tpu.memory_space<vmem>>, vector<1x8x4xf32>
    %32 = vector.shape_cast %31 : vector<1x8x4xf32> to vector<8x4xf32>
    %cst_31 = arith.constant dense<0.000000e+00> : vector<8x384xf32>
    %33 = tpu.matmul %32, %30, %cst_31 {dimension_numbers = #tpu.dot_dimension_numbers<[1], [0], [0], [1], [0, 0, 1, 1], [], []>} : vector<8x4xf32>, vector<4x384xf32>, vector<8x384xf32> -> vector<8x384xf32>
    %34 = arith.addf %28, %33 : vector<8x384xf32>
    %c0_32 = arith.constant 0 : index
    %c0_33 = arith.constant 0 : index
    %c36 = arith.constant 36 : index
    %35 = vector.load %arg1[%c0_32, %c0_33, %c36] : memref<1x4x512xf32, #tpu.memory_space<vmem>>, vector<1x4x384xf32>
    %36 = vector.shape_cast %35 : vector<1x4x384xf32> to vector<4x384xf32>
    %c6 = arith.constant 6 : index
    %c0_34 = arith.constant 0 : index
    %c0_35 = arith.constant 0 : index
    %37 = vector.load %arg2[%c6, %c0_34, %c0_35] : memref<9x8x4xf32, #tpu.memory_space<vmem>>, vector<1x8x4xf32>
    %38 = vector.shape_cast %37 : vector<1x8x4xf32> to vector<8x4xf32>
    %cst_36 = arith.constant dense<0.000000e+00> : vector<8x384xf32>
    %39 = tpu.matmul %38, %36, %cst_36 {dimension_numbers = #tpu.dot_dimension_numbers<[1], [0], [0], [1], [0, 0, 1, 1], [], []>} : vector<8x4xf32>, vector<4x384xf32>, vector<8x384xf32> -> vector<8x384xf32>
    %40 = arith.addf %34, %39 : vector<8x384xf32>
    %c0_37 = arith.constant 0 : index
    %c0_38 = arith.constant 0 : index
    %c37 = arith.constant 37 : index
    %41 = vector.load %arg1[%c0_37, %c0_38, %c37] : memref<1x4x512xf32, #tpu.memory_space<vmem>>, vector<1x4x384xf32>
    %42 = vector.shape_cast %41 : vector<1x4x384xf32> to vector<4x384xf32>
    %c7 = arith.constant 7 : index
    %c0_39 = arith.constant 0 : index
    %c0_40 = arith.constant 0 : index
    %43 = vector.load %arg2[%c7, %c0_39, %c0_40] : memref<9x8x4xf32, #tpu.memory_space<vmem>>, vector<1x8x4xf32>
    %44 = vector.shape_cast %43 : vector<1x8x4xf32> to vector<8x4xf32>
    %cst_41 = arith.constant dense<0.000000e+00> : vector<8x384xf32>
    %45 = tpu.matmul %44, %42, %cst_41 {dimension_numbers = #tpu.dot_dimension_numbers<[1], [0], [0], [1], [0, 0, 1, 1], [], []>} : vector<8x4xf32>, vector<4x384xf32>, vector<8x384xf32> -> vector<8x384xf32>
    %46 = arith.addf %40, %45 : vector<8x384xf32>
    %c0_42 = arith.constant 0 : index
    %c0_43 = arith.constant 0 : index
    %c38 = arith.constant 38 : index
    %47 = vector.load %arg1[%c0_42, %c0_43, %c38] : memref<1x4x512xf32, #tpu.memory_space<vmem>>, vector<1x4x384xf32>
    %48 = vector.shape_cast %47 : vector<1x4x384xf32> to vector<4x384xf32>
    %c8 = arith.constant 8 : index
    %c0_44 = arith.constant 0 : index
    %c0_45 = arith.constant 0 : index
    %49 = vector.load %arg2[%c8, %c0_44, %c0_45] : memref<9x8x4xf32, #tpu.memory_space<vmem>>, vector<1x8x4xf32>
    %50 = vector.shape_cast %49 : vector<1x8x4xf32> to vector<8x4xf32>
    %cst_46 = arith.constant dense<0.000000e+00> : vector<8x384xf32>
    %51 = tpu.matmul %50, %48, %cst_46 {dimension_numbers = #tpu.dot_dimension_numbers<[1], [0], [0], [1], [0, 0, 1, 1], [], []>} : vector<8x4xf32>, vector<4x384xf32>, vector<8x384xf32> -> vector<8x384xf32>
    %52 = arith.addf %46, %51 : vector<8x384xf32>
    %c0_47 = arith.constant 0 : index
    %c0_48 = arith.constant 0 : index
    %53 = vector.load %arg3[%c0_47, %c0_48] : memref<8x1xf32, #tpu.memory_space<vmem>>, vector<8x1xf32>
    %54 = vector.broadcast %53 : vector<8x1xf32> to vector<8x384xf32>
    %55 = arith.addf %52, %54 : vector<8x384xf32>
    %c0_49 = arith.constant 0 : index
    %c0_50 = arith.constant 0 : index
    %c0_51 = arith.constant 0 : index
    %56 = vector.load %arg4[%c0_49, %c0_50, %c0_51] : memref<1x8x384xf32, #tpu.memory_space<vmem>>, vector<1x8x384xf32>
    %57 = vector.shape_cast %56 : vector<1x8x384xf32> to vector<8x384xf32>
    %58 = vector.shape_cast %55 : vector<8x384xf32> to vector<1x8x384xf32>
    tpu.vector_store %arg4[%c0_49, %c0_50, %c0_51], %58 {strides = array<i32>} : memref<1x8x384xf32, #tpu.memory_space<vmem>>, vector<1x8x384xf32>,
    return
  }
  func.func @transform_0(%arg0: i32) -> (i32, i32, i32) {
    %c0_i32 = arith.constant 0 : i32
    %c0_i32_0 = arith.constant 0 : i32
    %c0_i32_1 = arith.constant 0 : i32
    return %arg0, %c0_i32, %c0_i32_0 : i32, i32, i32
  }
  func.func @transform_1(%arg0: i32) -> (i32, i32, i32) {
    %c0_i32 = arith.constant 0 : i32
    %c0_i32_0 = arith.constant 0 : i32
    %c0_i32_1 = arith.constant 0 : i32
    %c0_i32_2 = arith.constant 0 : i32
    return %c0_i32, %c0_i32_0, %c0_i32_1 : i32, i32, i32
  }
  func.func @transform_2(%arg0: i32) -> (i32, i32) {
    %c0_i32 = arith.constant 0 : i32
    %c0_i32_0 = arith.constant 0 : i32
    %c0_i32_1 = arith.constant 0 : i32
    return %c0_i32, %c0_i32_0 : i32, i32
  }
  func.func @transform_3(%arg0: i32) -> (i32, i32, i32) {
    %c0_i32 = arith.constant 0 : i32
    %c0_i32_0 = arith.constant 0 : i32
    %c0_i32_1 = arith.constant 0 : i32
    return %arg0, %c0_i32, %c0_i32_0 : i32, i32, i32
  }
}

</mosaic_0001>

<llo_original>
// kernel: tpu_custom_call.1
$region0: #{tpu_custom_call.1}
  #allocation0 [shape = 'u32[]', space=smem, size = 0x4, offset = 0x4, fixed_abs, tag = 'smem constant byte address 0x4 - core index']
  #allocation1 [shape = 'u32[144,128]{1,0:T(1,128)}', space=vmem, size = 0x12000, scoped, tag = 'internal scratch']
  %s0 = inlined_call_operand.vmem [shape: f32[2,4,512], index: 0, kind: input, shape index: {}]
  %s1 = inlined_call_operand.vmem [shape: f32[9,8,4], index: 1, kind: input, shape index: {}]
  %s2 = inlined_call_operand.vmem [shape: f32[8,1], index: 2, kind: input, shape index: {}]
  %s3 = inlined_call_operand.hbm [shape: f32[2,8,384], index: 3, kind: output, shape index: {}]
  %s4 = sld [smem:[#allocation0]]
  $region45: #{tpu_custom_call.1} parent=0
    _
  %s6 = ssub.s32 1, %s4
  %s7 = scalar_select 0, %s6, %s4
  $region1: #{tpu_custom_call.1} parent=0
    #allocation2 [shape = 'u8[24576]{0}', space=vmem, size = 0x6000, scoped, tag = 'output window, operand 0']
    #allocation3 [shape = 's32[2]{0}', space=sflag, size = 0x8, scoped, tag = 'scoped memory for tpu_custom_call.1']
    %8 = vsyncpa [#allocation3], 0
    %s9 = scalar_lea.sflag [#allocation3], 1
    %10 = vsyncpa %s9, 0
    loop: start=0, step=1, limit=4
    $region2: #{tpu_custom_call.1} parent=1 // loop_pre_header
      _
    $region3: #{tpu_custom_call.1} parent=1 // loop_header
      %s12 = sphi 0, %s16
      %p13 = scmp.ge.s32.totalorder %s12, 4
      %s22 = sphi 0, %s24
      %s25 = sphi 0, %s22
      %s26 = sphi 0, %s25
      %s42 = sphi 0, %s26
      %s46 = sphi 0, %s46
      %s48 = sphi 0, %s46
      %s49 = sphi 0, %s48
      %s63 = sphi 0, %s49
      %s67 = sphi 0, %s67
      %s69 = sphi 0, %s67
      %s70 = sphi 0, %s69
      %s84 = sphi 0, %s70
      %s90 = sphi 0, %s92
      %s93 = sphi 0, %s90
      %s94 = sphi 0, %s93
      %s110 = sphi 0, %s94
    $region4: #{tpu_custom_call.1} parent=1 // loop_header_branch
      %15 = sbr.rel (%p13) target = $region8
    $region5: #{tpu_custom_call.1} parent=1 // loop_body
      %s17 = ssub.s32 %s12, 1
      %s18 = ssub.s32 %s12, 2
      %s19 = sadd.s32 %s12, 1
      %s20 = ssub.s32 %s12, %s19
      %p21 = scmp.eq.s32.totalorder %s20, 0
      %s23 = sadd.s32 %s22, 1
      %s24 = scalar_select %p21, %s22, %s23
      %p27 = pneg %p21
      %p28 = scmp.eq.s32.totalorder %s12, 1
      %p29 = por %p27, %p28
      %p30 = scmp.ne.s32.totalorder %s22, %s25
      %p31 = scmp.eq.s32.totalorder %s12, 0
      %p32 = por %p30, %p31
      %p33 = scmp.ne.s32.totalorder %s22, %s25
      %p34 = scmp.eq.s32.totalorder %s17, 1
      %p35 = por %p33, %p34
      %p36 = scmp.ne.s32.totalorder %s25, %s26
      %p37 = scmp.eq.s32.totalorder %s17, 0
      %p38 = por %p36, %p37
      %p39 = scmp.ne.s32.totalorder %s25, %s26
      %p40 = scmp.eq.s32.totalorder %s18, 1
      %p41 = por %p39, %p40
      %p43 = scmp.ne.s32.totalorder %s26, %s42
      %p44 = scmp.eq.s32.totalorder %s18, 0
      %p45 = por %p43, %p44
      %s47 = sadd.s32 %s46, 1
      %p50 = scmp.eq.s32.totalorder %s12, 1
      %p51 = scmp.ne.s32.totalorder %s46, %s48
      %p52 = scmp.eq.s32.totalorder %s12, 0
      %p53 = por %p51, %p52
      %p54 = scmp.ne.s32.totalorder %s46, %s48
      %p55 = scmp.eq.s32.totalorder %s17, 1
      %p56 = por %p54, %p55
      %p57 = scmp.ne.s32.totalorder %s48, %s49
      %p58 = scmp.eq.s32.totalorder %s17, 0
      %p59 = por %p57, %p58
      %p60 = scmp.ne.s32.totalorder %s48, %s49
      %p61 = scmp.eq.s32.totalorder %s18, 1
      %p62 = por %p60, %p61
      %p64 = scmp.ne.s32.totalorder %s49, %s63
      %p65 = scmp.eq.s32.totalorder %s18, 0
      %p66 = por %p64, %p65
      %s68 = sadd.s32 %s67, 1
      %p71 = scmp.eq.s32.totalorder %s12, 1
      %p72 = scmp.ne.s32.totalorder %s67, %s69
      %p73 = scmp.eq.s32.totalorder %s12, 0
      %p74 = por %p72, %p73
      %p75 = scmp.ne.s32.totalorder %s67, %s69
      %p76 = scmp.eq.s32.totalorder %s17, 1
      %p77 = por %p75, %p76
      %p78 = scmp.ne.s32.totalorder %s69, %s70
      %p79 = scmp.eq.s32.totalorder %s17, 0
      %p80 = por %p78, %p79
      %p81 = scmp.ne.s32.totalorder %s69, %s70
      %p82 = scmp.eq.s32.totalorder %s18, 1
      %p83 = por %p81, %p82
      %p85 = scmp.ne.s32.totalorder %s70, %s84
      %p86 = scmp.eq.s32.totalorder %s18, 0
      %p87 = por %p85, %p86
      %s88 = ssub.s32 %s12, %s19
      %p89 = scmp.eq.s32.totalorder %s88, 0
      %s91 = sadd.s32 %s90, 1
      %s92 = scalar_select %p89, %s90, %s91
      %p95 = pneg %p89
      %p96 = scmp.eq.s32.totalorder %s12, 1
      %p97 = por %p95, %p96
      %p98 = scmp.ne.s32.totalorder %s90, %s93
      %p99 = scmp.eq.s32.totalorder %s12, 0
      %p100 = por %p98, %p99
      %p101 = scmp.ne.s32.totalorder %s90, %s93
      %p102 = scmp.eq.s32.totalorder %s17, 1
      %p103 = por %p101, %p102
      %p104 = scmp.ne.s32.totalorder %s93, %s94
      %p105 = scmp.eq.s32.totalorder %s17, 0
      %p106 = por %p104, %p105
      %p107 = scmp.ne.s32.totalorder %s93, %s94
      %p108 = scmp.eq.s32.totalorder %s18, 1
      %p109 = por %p107, %p108
      %p111 = scmp.ne.s32.totalorder %s94, %s110
      %p112 = scmp.eq.s32.totalorder %s18, 0
      %p113 = por %p111, %p112
      %p114 = scmp.le.s32.totalorder 1, %s12
      %p115 = scmp.lt.s32.totalorder %s12, 3
      %p116 = pnand %p114, %p115
      %p117 = pneg %p116
      // Predicated region
      $region9: #{tpu_custom_call.1} parent=5 // pred_check
        _
      $region10: #{tpu_custom_call.1} parent=5 // pred_check_branch
        %119 = sbr.rel (%p116) target = $region12
      $region11: #{tpu_custom_call.1} parent=5 // pred_region
        %s120 = ssub.s32 %s12, 1
        // Predicated region
        $region13: #{tpu_custom_call.1} parent=11 // pred_check
          %p121 = pneg %p59
        $region14: #{tpu_custom_call.1} parent=11 // pred_check_branch
          %123 = sbr.rel (%p121) target = $region16
        $region15: #{tpu_custom_call.1} parent=11 // pred_region
          _
        $region16: #{tpu_custom_call.1} parent=11 // pred_fallthru
          _
        // Predicated region
        $region17: #{tpu_custom_call.1} parent=11 // pred_check
          %p124 = pneg %p80
        $region18: #{tpu_custom_call.1} parent=11 // pred_check_branch
          %126 = sbr.rel (%p124) target = $region20
        $region19: #{tpu_custom_call.1} parent=11 // pred_region
          _
        $region20: #{tpu_custom_call.1} parent=11 // pred_fallthru
          _
      $region12: #{tpu_custom_call.1} parent=5 // pred_fallthru
        _
      %p127 = scmp.lt.s32.totalorder %s12, 2
      // Predicated region
      $region21: #{tpu_custom_call.1} parent=5 // pred_check
        %p128 = pneg %p127
      $region22: #{tpu_custom_call.1} parent=5 // pred_check_branch
        %130 = sbr.rel (%p128) target = $region24
      $region23: #{tpu_custom_call.1} parent=5 // pred_region
        // Predicated region
        $region25: #{tpu_custom_call.1} parent=23 // pred_check
          %p131 = pneg %p32
        $region26: #{tpu_custom_call.1} parent=23 // pred_check_branch
          %133 = sbr.rel (%p131) target = $region28
        $region27: #{tpu_custom_call.1} parent=23 // pred_region
          %p134 = scmp.lt.s32.totalorder %s12, 1
          %s135 = scalar_select %p134, %s12, 1
          %s136 = smul.addr %s135, 4
          %s137 = smul.addr %s136, 4
          %s138 = scalar_lea.vmem %s0, %s137
        $region28: #{tpu_custom_call.1} parent=23 // pred_fallthru
          _
      $region24: #{tpu_custom_call.1} parent=5 // pred_fallthru
        _
      %p139 = scmp.le.s32.totalorder 1, %s12
      %p140 = scmp.lt.s32.totalorder %s12, 3
      %p141 = pnand %p139, %p140
      %p142 = pneg %p141
      // Predicated region
      $region29: #{tpu_custom_call.1} parent=5 // pred_check
        _
      $region30: #{tpu_custom_call.1} parent=5 // pred_check_branch
        %144 = sbr.rel (%p141) target = $region32
      $region31: #{tpu_custom_call.1} parent=5 // pred_region
        %s145 = ssub.s32 %s12, 1
        %p146 = scmp.lt.s32.totalorder %s17, 1
        %s147 = scalar_select %p146, %s17, 1
        %s148 = smul.addr %s147, 4
        %s149 = smul.addr %s148, 4
        %s150 = scalar_lea.vmem %s0, %s149
        %p151 = pneg %p38
        %p152 = pneg %p35
        %p153 = pneg %p59
        %p154 = pneg %p56
        %p155 = pneg %p80
        %p156 = pneg %p77
        %p157 = pneg %p106
        %p158 = pneg %p103
        %s159 = sand.u32 %s93, 1
        %s160 = scalar_lea.sflag [#allocation3], %s159
        %s161 = sand.u32 %s93, 1
        %s162 = smul.addr %s161, 24
        %s163 = scalar_lea.vmem [#allocation2], %s162
        %p164 = scmp.lt.s32.totalorder %s17, 1
        %s165 = scalar_select %p164, %s17, 1
        %s166 = smul.addr %s165, 4
        %s167 = smul.addr %s166, 4
        %s168 = scalar_lea.vmem %s0, %s167
        %v169 = vld [vmem:[%s168] sm:$0xff]
        %v170 = vld [vmem:[%s168 + $0x8] sm:$0xf]
        %v171 = vld [vmem:[%s1] sm:$0xff]
        %v172 = vld [vmem:[%s168] sm:$0xff]
        %v173 = vld [vmem:[%s168 + $0x8] sm:$0xff]
        %s174 = scalar_lea.vmem %s1, 8
        %v175 = vld [vmem:[%s174] sm:$0xff]
        %v178 = vcombine.high %v172, %v172
        %v179 = vcombine.high %v173, %v173
        %180 = vrot.lane.b32.xlu0 %v172, 127
        %v181 = vpop.permute.xlu0 %180
        %182 = vrot.lane.b32.xlu0 %v178, 127
        %v183 = vpop.permute.xlu0 %182
        %184 = vrot.lane.b32.xlu0 %v173, 127
        %v185 = vpop.permute.xlu0 %184
        %186 = vrot.lane.b32.xlu0 %v179, 127
        %v187 = vpop.permute.xlu0 %186
        %vm188 = vcmask 1039360
        %v189 = vsel %vm188, %v181, %v183
        %v190 = vsel %vm188, %v183, %v185
        %v191 = vsel %vm188, %v185, %v187
        %vm192 = vcmask 31744
        %v194 = vsel %vm192, %v175, 0
        %vm196 = vcmask 1043456
        %v197 = vsel %vm196, %v189, 0
        %v199 = vsel %vm196, %v190, 0
        %v201 = vsel %vm196, %v191, 0
        %203 = vmatprep.subr.mxu0 %v199
        %204 = vmatpush1.msra.mxu0 %v197
        %205 = vmatprep.subr.mxu0 0.0
        %206 = vmatpush1.msra.mxu0 0.0
        %207 = vmatprep.subr.mxu0 0.0
        %208 = vmatpush1.msra.mxu0 0.0
        %209 = vmatprep.subr.mxu0 0.0
        %210 = vmatpush1.msra.mxu0 0.0
        %211 = vmatprep.subr.mxu0 0.0
        %212 = vmatpush1.msra.mxu0 0.0
        %213 = vmatprep.subr.mxu0 0.0
        %214 = vmatpush1.msra.mxu0 0.0
        %215 = vmatprep.subr.mxu0 0.0
        %216 = vmatpush1.msra.mxu0 0.0
        %217 = vmatprep.subr.mxu0 0.0
        %218 = vmatpush1.msra.mxu0 0.0
        %219 = vmatprep.subr.mxu0 0.0
        %220 = vmatpush1.msra.mxu0 0.0
        %221 = vmatprep.subr.mxu0 0.0
        %222 = vmatpush1.msra.mxu0 0.0
        %223 = vmatprep.subr.mxu0 0.0
        %224 = vmatpush1.msra.mxu0 0.0
        %225 = vmatprep.subr.mxu0 0.0
        %226 = vmatpush1.msra.mxu0 0.0
        %227 = vmatprep.subr.mxu0 0.0
        %228 = vmatpush1.msra.mxu0 0.0
        %229 = vmatprep.subr.mxu0 0.0
        %230 = vmatpush1.msra.mxu0 0.0
        %231 = vmatprep.subr.mxu0 0.0
        %232 = vmatpush1.msra.mxu0 0.0
        %233 = vmatprep.subr.mxu0 0.0
        %234 = vmatpush1.msra.mxu0 0.0
        %235 = vmatprep.subr.mxu0 0.0
        %236 = vmatpush1.msra.mxu0 0.0
        %237 = vmatprep.subr.mxu0 0.0
        %238 = vmatpush1.msra.mxu0 0.0
        %239 = vmatprep.subr.mxu0 0.0
        %240 = vmatpush1.msra.mxu0 0.0
        %241 = vmatprep.subr.mxu0 0.0
        %242 = vmatpush1.msra.mxu0 0.0
        %243 = vmatprep.subr.mxu0 0.0
        %244 = vmatpush1.msra.mxu0 0.0
        %245 = vmatprep.subr.mxu0 0.0
        %246 = vmatpush1.msra.mxu0 0.0
        %247 = vmatprep.subr.mxu0 0.0
        %248 = vmatpush1.msra.mxu0 0.0
        %249 = vmatprep.subr.mxu0 0.0
        %250 = vmatpush1.msra.mxu0 0.0
        %251 = vmatprep.subr.mxu0 0.0
        %252 = vmatpush1.msra.mxu0 0.0
        %253 = vmatprep.subr.mxu0 0.0
        %254 = vmatpush1.msra.mxu0 0.0
        %255 = vmatprep.subr.mxu0 0.0
        %256 = vmatpush1.msra.mxu0 0.0
        %257 = vmatprep.subr.mxu0 0.0
        %258 = vmatpush1.msra.mxu0 0.0
        %259 = vmatprep.subr.mxu0 0.0
        %260 = vmatpush1.msra.mxu0 0.0
        %261 = vmatprep.subr.mxu0 0.0
        %262 = vmatpush1.msra.mxu0 0.0
        %263 = vmatprep.subr.mxu0 0.0
        %264 = vmatpush1.msra.mxu0 0.0
        %265 = vmatprep.subr.mxu0 0.0
        %266 = vmatpush1.msra.mxu0 0.0
        %267 = vmatprep.mubr.f32.mxu0 0.0
        %268 = vmatmul.mubr.f32.gmra.mrb[0].mxu0 %v194
        %v269 = vpop.f32.mrb[0].mxu0
        %v270 = vadd.f32 0.0, %v269
        %v271 = vpop.f32.mrb[0].mxu0
        %v272 = vadd.f32 0.0, %v271
        %273 = vdwg.mxu0
        %274 = vmatprep.subr.mxu0 0.0
        %275 = vmatpush1.msra.mxu0 %v201
        %276 = vmatprep.subr.mxu0 0.0
        %277 = vmatpush1.msra.mxu0 0.0
        %278 = vmatprep.subr.mxu0 0.0
        %279 = vmatpush1.msra.mxu0 0.0
        %280 = vmatprep.subr.mxu0 0.0
        %281 = vmatpush1.msra.mxu0 0.0
        %282 = vmatprep.subr.mxu0 0.0
        %283 = vmatpush1.msra.mxu0 0.0
        %284 = vmatprep.subr.mxu0 0.0
        %285 = vmatpush1.msra.mxu0 0.0
        %286 = vmatprep.subr.mxu0 0.0
        %287 = vmatpush1.msra.mxu0 0.0
        %288 = vmatprep.subr.mxu0 0.0
        %289 = vmatpush1.msra.mxu0 0.0
        %290 = vmatprep.subr.mxu0 0.0
        %291 = vmatpush1.msra.mxu0 0.0
        %292 = vmatprep.subr.mxu0 0.0
        %293 = vmatpush1.msra.mxu0 0.0
        %294 = vmatprep.subr.mxu0 0.0
        %295 = vmatpush1.msra.mxu0 0.0
        %296 = vmatprep.subr.mxu0 0.0
        %297 = vmatpush1.msra.mxu0 0.0
        %298 = vmatprep.subr.mxu0 0.0
        %299 = vmatpush1.msra.mxu0 0.0
        %300 = vmatprep.subr.mxu0 0.0
        %301 = vmatpush1.msra.mxu0 0.0
        %302 = vmatprep.subr.mxu0 0.0
        %303 = vmatpush1.msra.mxu0 0.0
        %304 = vmatprep.subr.mxu0 0.0
        %305 = vmatpush1.msra.mxu0 0.0
        %306 = vmatprep.subr.mxu0 0.0
        %307 = vmatpush1.msra.mxu0 0.0
        %308 = vmatprep.subr.mxu0 0.0
        %309 = vmatpush1.msra.mxu0 0.0
        %310 = vmatprep.subr.mxu0 0.0
        %311 = vmatpush1.msra.mxu0 0.0
        %312 = vmatprep.subr.mxu0 0.0
        %313 = vmatpush1.msra.mxu0 0.0
        %314 = vmatprep.subr.mxu0 0.0
        %315 = vmatpush1.msra.mxu0 0.0
        %316 = vmatprep.subr.mxu0 0.0
        %317 = vmatpush1.msra.mxu0 0.0
        %318 = vmatprep.subr.mxu0 0.0
        %319 = vmatpush1.msra.mxu0 0.0
        %320 = vmatprep.subr.mxu0 0.0
        %321 = vmatpush1.msra.mxu0 0.0
        %322 = vmatprep.subr.mxu0 0.0
        %323 = vmatpush1.msra.mxu0 0.0
        %324 = vmatprep.subr.mxu0 0.0
        %325 = vmatpush1.msra.mxu0 0.0
        %326 = vmatprep.subr.mxu0 0.0
        %327 = vmatpush1.msra.mxu0 0.0
        %328 = vmatprep.subr.mxu0 0.0
        %329 = vmatpush1.msra.mxu0 0.0
        %330 = vmatprep.subr.mxu0 0.0
        %331 = vmatpush1.msra.mxu0 0.0
        %332 = vmatprep.subr.mxu0 0.0
        %333 = vmatpush1.msra.mxu0 0.0
        %334 = vmatprep.subr.mxu0 0.0
        %335 = vmatpush1.msra.mxu0 0.0
        %336 = vmatprep.subr.mxu0 0.0
        %337 = vmatpush1.msra.mxu0 0.0
        %338 = vmatprep.mubr.f32.mxu0 0.0
        %339 = vmatmul.mubr.f32.gmra.mrb[0].mxu0 %v194
        %v340 = vpop.f32.mrb[0].mxu0
        %v341 = vadd.f32 0.0, %v340
        %v342 = vpop.f32.mrb[0].mxu0
        %343 = vdwg.mxu0
        %v346 = vcombine.high %v169, %v169
        %v348 = vsel %vm192, %v171, 0
        %v350 = vsel %vm196, %v169, 0
        %v352 = vsel %vm196, %v346, 0
        %v354 = vsel %vm196, %v170, 0
        %356 = vmatprep.subr.mxu0 %v352
        %357 = vmatpush1.msra.mxu0 %v350
        %358 = vmatprep.subr.mxu0 0.0
        %359 = vmatpush1.msra.mxu0 0.0
        %360 = vmatprep.subr.mxu0 0.0
        %361 = vmatpush1.msra.mxu0 0.0
        %362 = vmatprep.subr.mxu0 0.0
        %363 = vmatpush1.msra.mxu0 0.0
        %364 = vmatprep.subr.mxu0 0.0
        %365 = vmatpush1.msra.mxu0 0.0
        %366 = vmatprep.subr.mxu0 0.0
        %367 = vmatpush1.msra.mxu0 0.0
        %368 = vmatprep.subr.mxu0 0.0
        %369 = vmatpush1.msra.mxu0 0.0
        %370 = vmatprep.subr.mxu0 0.0
        %371 = vmatpush1.msra.mxu0 0.0
        %372 = vmatprep.subr.mxu0 0.0
        %373 = vmatpush1.msra.mxu0 0.0
        %374 = vmatprep.subr.mxu0 0.0
        %375 = vmatpush1.msra.mxu0 0.0
        %376 = vmatprep.subr.mxu0 0.0
        %377 = vmatpush1.msra.mxu0 0.0
        %378 = vmatprep.subr.mxu0 0.0
        %379 = vmatpush1.msra.mxu0 0.0
        %380 = vmatprep.subr.mxu0 0.0
        %381 = vmatpush1.msra.mxu0 0.0
        %382 = vmatprep.subr.mxu0 0.0
        %383 = vmatpush1.msra.mxu0 0.0
        %384 = vmatprep.subr.mxu0 0.0
        %385 = vmatpush1.msra.mxu0 0.0
        %386 = vmatprep.subr.mxu0 0.0
        %387 = vmatpush1.msra.mxu0 0.0
        %388 = vmatprep.subr.mxu0 0.0
        %389 = vmatpush1.msra.mxu0 0.0
        %390 = vmatprep.subr.mxu0 0.0
        %391 = vmatpush1.msra.mxu0 0.0
        %392 = vmatprep.subr.mxu0 0.0
        %393 = vmatpush1.msra.mxu0 0.0
        %394 = vmatprep.subr.mxu0 0.0
        %395 = vmatpush1.msra.mxu0 0.0
        %396 = vmatprep.subr.mxu0 0.0
        %397 = vmatpush1.msra.mxu0 0.0
        %398 = vmatprep.subr.mxu0 0.0
        %399 = vmatpush1.msra.mxu0 0.0
        %400 = vmatprep.subr.mxu0 0.0
        %401 = vmatpush1.msra.mxu0 0.0
        %402 = vmatprep.subr.mxu0 0.0
        %403 = vmatpush1.msra.mxu0 0.0
        %404 = vmatprep.subr.mxu0 0.0
        %405 = vmatpush1.msra.mxu0 0.0
        %406 = vmatprep.subr.mxu0 0.0
        %407 = vmatpush1.msra.mxu0 0.0
        %408 = vmatprep.subr.mxu0 0.0
        %409 = vmatpush1.msra.mxu0 0.0
        %410 = vmatprep.subr.mxu0 0.0
        %411 = vmatpush1.msra.mxu0 0.0
        %412 = vmatprep.subr.mxu0 0.0
        %413 = vmatpush1.msra.mxu0 0.0
        %414 = vmatprep.subr.mxu0 0.0
        %415 = vmatpush1.msra.mxu0 0.0
        %416 = vmatprep.subr.mxu0 0.0
        %417 = vmatpush1.msra.mxu0 0.0
        %418 = vmatprep.subr.mxu0 0.0
        %419 = vmatpush1.msra.mxu0 0.0
        %420 = vmatprep.mubr.f32.mxu0 0.0
        %421 = vmatmul.mubr.f32.gmra.mrb[0].mxu0 %v348
        %v422 = vpop.f32.mrb[0].mxu0
        %v423 = vadd.f32 %v270, %v422
        %v424 = vpop.f32.mrb[0].mxu0
        %v425 = vadd.f32 %v272, %v424
        %426 = vdwg.mxu0
        %427 = vmatprep.subr.mxu0 0.0
        %428 = vmatpush1.msra.mxu0 %v354
        %429 = vmatprep.subr.mxu0 0.0
        %430 = vmatpush1.msra.mxu0 0.0
        %431 = vmatprep.subr.mxu0 0.0
        %432 = vmatpush1.msra.mxu0 0.0
        %433 = vmatprep.subr.mxu0 0.0
        %434 = vmatpush1.msra.mxu0 0.0
        %435 = vmatprep.subr.mxu0 0.0
        %436 = vmatpush1.msra.mxu0 0.0
        %437 = vmatprep.subr.mxu0 0.0
        %438 = vmatpush1.msra.mxu0 0.0
        %439 = vmatprep.subr.mxu0 0.0
        %440 = vmatpush1.msra.mxu0 0.0
        %441 = vmatprep.subr.mxu0 0.0
        %442 = vmatpush1.msra.mxu0 0.0
        %443 = vmatprep.subr.mxu0 0.0
        %444 = vmatpush1.msra.mxu0 0.0
        %445 = vmatprep.subr.mxu0 0.0
        %446 = vmatpush1.msra.mxu0 0.0
        %447 = vmatprep.subr.mxu0 0.0
        %448 = vmatpush1.msra.mxu0 0.0
        %449 = vmatprep.subr.mxu0 0.0
        %450 = vmatpush1.msra.mxu0 0.0
        %451 = vmatprep.subr.mxu0 0.0
        %452 = vmatpush1.msra.mxu0 0.0
        %453 = vmatprep.subr.mxu0 0.0
        %454 = vmatpush1.msra.mxu0 0.0
        %455 = vmatprep.subr.mxu0 0.0
        %456 = vmatpush1.msra.mxu0 0.0
        %457 = vmatprep.subr.mxu0 0.0
        %458 = vmatpush1.msra.mxu0 0.0
        %459 = vmatprep.subr.mxu0 0.0
        %460 = vmatpush1.msra.mxu0 0.0
        %461 = vmatprep.subr.mxu0 0.0
        %462 = vmatpush1.msra.mxu0 0.0
        %463 = vmatprep.subr.mxu0 0.0
        %464 = vmatpush1.msra.mxu0 0.0
        %465 = vmatprep.subr.mxu0 0.0
        %466 = vmatpush1.msra.mxu0 0.0
        %467 = vmatprep.subr.mxu0 0.0
        %468 = vmatpush1.msra.mxu0 0.0
        %469 = vmatprep.subr.mxu0 0.0
        %470 = vmatpush1.msra.mxu0 0.0
        %471 = vmatprep.subr.mxu0 0.0
        %472 = vmatpush1.msra.mxu0 0.0
        %473 = vmatprep.subr.mxu0 0.0
        %474 = vmatpush1.msra.mxu0 0.0
        %475 = vmatprep.subr.mxu0 0.0
        %476 = vmatpush1.msra.mxu0 0.0
        %477 = vmatprep.subr.mxu0 0.0
        %478 = vmatpush1.msra.mxu0 0.0
        %479 = vmatprep.subr.mxu0 0.0
        %480 = vmatpush1.msra.mxu0 0.0
        %481 = vmatprep.subr.mxu0 0.0
        %482 = vmatpush1.msra.mxu0 0.0
        %483 = vmatprep.subr.mxu0 0.0
        %484 = vmatpush1.msra.mxu0 0.0
        %485 = vmatprep.subr.mxu0 0.0
        %486 = vmatpush1.msra.mxu0 0.0
        %487 = vmatprep.subr.mxu0 0.0
        %488 = vmatpush1.msra.mxu0 0.0
        %489 = vmatprep.subr.mxu0 0.0
        %490 = vmatpush1.msra.mxu0 0.0
        %491 = vmatprep.mubr.f32.mxu0 0.0
        %492 = vmatmul.mubr.f32.gmra.mrb[0].mxu0 %v348
        %v493 = vpop.f32.mrb[0].mxu0
        %v494 = vadd.f32 %v341, %v493
        %v495 = vpop.f32.mrb[0].mxu0
        %496 = vdwg.mxu0
        %v497 = vld [vmem:[%s168] sm:$0xff]
        %v498 = vld [vmem:[%s168 + $0x8] sm:$0xff]
        %s499 = scalar_lea.vmem %s1, 16
        %v500 = vld [vmem:[%s499] sm:$0xff]
        %v503 = vcombine.high %v497, %v497
        %v504 = vcombine.high %v498, %v498
        %505 = vrot.lane.b32.xlu0 %v497, 126
        %v506 = vpop.permute.xlu0 %505
        %507 = vrot.lane.b32.xlu0 %v503, 126
        %v508 = vpop.permute.xlu0 %507
        %509 = vrot.lane.b32.xlu0 %v498, 126
        %v510 = vpop.permute.xlu0 %509
        %511 = vrot.lane.b32.xlu0 %v504, 126
        %v512 = vpop.permute.xlu0 %511
        %vm513 = vcmask 1031168
        %v514 = vsel %vm513, %v506, %v508
        %v515 = vsel %vm513, %v508, %v510
        %v516 = vsel %vm513, %v510, %v512
        %v518 = vsel %vm192, %v500, 0
        %v520 = vsel %vm196, %v514, 0
        %v522 = vsel %vm196, %v515, 0
        %v524 = vsel %vm196, %v516, 0
        %526 = vmatprep.subr.mxu0 %v522
        %527 = vmatpush1.msra.mxu0 %v520
        %528 = vmatprep.subr.mxu0 0.0
        %529 = vmatpush1.msra.mxu0 0.0
        %530 = vmatprep.subr.mxu0 0.0
        %531 = vmatpush1.msra.mxu0 0.0
        %532 = vmatprep.subr.mxu0 0.0
        %533 = vmatpush1.msra.mxu0 0.0
        %534 = vmatprep.subr.mxu0 0.0
        %535 = vmatpush1.msra.mxu0 0.0
        %536 = vmatprep.subr.mxu0 0.0
        %537 = vmatpush1.msra.mxu0 0.0
        %538 = vmatprep.subr.mxu0 0.0
        %539 = vmatpush1.msra.mxu0 0.0
        %540 = vmatprep.subr.mxu0 0.0
        %541 = vmatpush1.msra.mxu0 0.0
        %542 = vmatprep.subr.mxu0 0.0
        %543 = vmatpush1.msra.mxu0 0.0
        %544 = vmatprep.subr.mxu0 0.0
        %545 = vmatpush1.msra.mxu0 0.0
        %546 = vmatprep.subr.mxu0 0.0
        %547 = vmatpush1.msra.mxu0 0.0
        %548 = vmatprep.subr.mxu0 0.0
        %549 = vmatpush1.msra.mxu0 0.0
        %550 = vmatprep.subr.mxu0 0.0
        %551 = vmatpush1.msra.mxu0 0.0
        %552 = vmatprep.subr.mxu0 0.0
        %553 = vmatpush1.msra.mxu0 0.0
        %554 = vmatprep.subr.mxu0 0.0
        %555 = vmatpush1.msra.mxu0 0.0
        %556 = vmatprep.subr.mxu0 0.0
        %557 = vmatpush1.msra.mxu0 0.0
        %558 = vmatprep.subr.mxu0 0.0
        %559 = vmatpush1.msra.mxu0 0.0
        %560 = vmatprep.subr.mxu0 0.0
        %561 = vmatpush1.msra.mxu0 0.0
        %562 = vmatprep.subr.mxu0 0.0
        %563 = vmatpush1.msra.mxu0 0.0
        %564 = vmatprep.subr.mxu0 0.0
        %565 = vmatpush1.msra.mxu0 0.0
        %566 = vmatprep.subr.mxu0 0.0
        %567 = vmatpush1.msra.mxu0 0.0
        %568 = vmatprep.subr.mxu0 0.0
        %569 = vmatpush1.msra.mxu0 0.0
        %570 = vmatprep.subr.mxu0 0.0
        %571 = vmatpush1.msra.mxu0 0.0
        %572 = vmatprep.subr.mxu0 0.0
        %573 = vmatpush1.msra.mxu0 0.0
        %574 = vmatprep.subr.mxu0 0.0
        %575 = vmatpush1.msra.mxu0 0.0
        %576 = vmatprep.subr.mxu0 0.0
        %577 = vmatpush1.msra.mxu0 0.0
        %578 = vmatprep.subr.mxu0 0.0
        %579 = vmatpush1.msra.mxu0 0.0
        %580 = vmatprep.subr.mxu0 0.0
        %581 = vmatpush1.msra.mxu0 0.0
        %582 = vmatprep.subr.mxu0 0.0
        %583 = vmatpush1.msra.mxu0 0.0
        %584 = vmatprep.subr.mxu0 0.0
        %585 = vmatpush1.msra.mxu0 0.0
        %586 = vmatprep.subr.mxu0 0.0
        %587 = vmatpush1.msra.mxu0 0.0
        %588 = vmatprep.subr.mxu0 0.0
        %589 = vmatpush1.msra.mxu0 0.0
        %590 = vmatprep.mubr.f32.mxu0 0.0
        %591 = vmatmul.mubr.f32.gmra.mrb[0].mxu0 %v518
        %v592 = vpop.f32.mrb[0].mxu0
        %v593 = vadd.f32 0.0, %v592
        %v594 = vpop.f32.mrb[0].mxu0
        %v595 = vadd.f32 0.0, %v594
        %596 = vdwg.mxu0
        %597 = vmatprep.subr.mxu0 0.0
        %598 = vmatpush1.msra.mxu0 %v524
        %599 = vmatprep.subr.mxu0 0.0
        %600 = vmatpush1.msra.mxu0 0.0
        %601 = vmatprep.subr.mxu0 0.0
        %602 = vmatpush1.msra.mxu0 0.0
        %603 = vmatprep.subr.mxu0 0.0
        %604 = vmatpush1.msra.mxu0 0.0
        %605 = vmatprep.subr.mxu0 0.0
        %606 = vmatpush1.msra.mxu0 0.0
        %607 = vmatprep.subr.mxu0 0.0
        %608 = vmatpush1.msra.mxu0 0.0
        %609 = vmatprep.subr.mxu0 0.0
        %610 = vmatpush1.msra.mxu0 0.0
        %611 = vmatprep.subr.mxu0 0.0
        %612 = vmatpush1.msra.mxu0 0.0
        %613 = vmatprep.subr.mxu0 0.0
        %614 = vmatpush1.msra.mxu0 0.0
        %615 = vmatprep.subr.mxu0 0.0
        %616 = vmatpush1.msra.mxu0 0.0
        %617 = vmatprep.subr.mxu0 0.0
        %618 = vmatpush1.msra.mxu0 0.0
        %619 = vmatprep.subr.mxu0 0.0
        %620 = vmatpush1.msra.mxu0 0.0
        %621 = vmatprep.subr.mxu0 0.0
        %622 = vmatpush1.msra.mxu0 0.0
        %623 = vmatprep.subr.mxu0 0.0
        %624 = vmatpush1.msra.mxu0 0.0
        %625 = vmatprep.subr.mxu0 0.0
        %626 = vmatpush1.msra.mxu0 0.0
        %627 = vmatprep.subr.mxu0 0.0
        %628 = vmatpush1.msra.mxu0 0.0
        %629 = vmatprep.subr.mxu0 0.0
        %630 = vmatpush1.msra.mxu0 0.0
        %631 = vmatprep.subr.mxu0 0.0
        %632 = vmatpush1.msra.mxu0 0.0
        %633 = vmatprep.subr.mxu0 0.0
        %634 = vmatpush1.msra.mxu0 0.0
        %635 = vmatprep.subr.mxu0 0.0
        %636 = vmatpush1.msra.mxu0 0.0
        %637 = vmatprep.subr.mxu0 0.0
        %638 = vmatpush1.msra.mxu0 0.0
        %639 = vmatprep.subr.mxu0 0.0
        %640 = vmatpush1.msra.mxu0 0.0
        %641 = vmatprep.subr.mxu0 0.0
        %642 = vmatpush1.msra.mxu0 0.0
        %643 = vmatprep.subr.mxu0 0.0
        %644 = vmatpush1.msra.mxu0 0.0
        %645 = vmatprep.subr.mxu0 0.0
        %646 = vmatpush1.msra.mxu0 0.0
        %647 = vmatprep.subr.mxu0 0.0
        %648 = vmatpush1.msra.mxu0 0.0
        %649 = vmatprep.subr.mxu0 0.0
        %650 = vmatpush1.msra.mxu0 0.0
        %651 = vmatprep.subr.mxu0 0.0
        %652 = vmatpush1.msra.mxu0 0.0
        %653 = vmatprep.subr.mxu0 0.0
        %654 = vmatpush1.msra.mxu0 0.0
        %655 = vmatprep.subr.mxu0 0.0
        %656 = vmatpush1.msra.mxu0 0.0
        %657 = vmatprep.subr.mxu0 0.0
        %658 = vmatpush1.msra.mxu0 0.0
        %659 = vmatprep.subr.mxu0 0.0
        %660 = vmatpush1.msra.mxu0 0.0
        %661 = vmatprep.mubr.f32.mxu0 0.0
        %662 = vmatmul.mubr.f32.gmra.mrb[0].mxu0 %v518
        %v663 = vpop.f32.mrb[0].mxu0
        %v664 = vadd.f32 0.0, %v663
        %v665 = vpop.f32.mrb[0].mxu0
        %666 = vdwg.mxu0
        %v667 = vadd.f32 %v423, %v593
        %v668 = vadd.f32 %v425, %v595
        %v669 = vadd.f32 %v494, %v664
        %v670 = vld [vmem:[%s168] sm:$0xff]
        %v671 = vld [vmem:[%s168 + $0x8] sm:$0xff]
        %s672 = scalar_lea.vmem %s1, 24
        %v673 = vld [vmem:[%s672] sm:$0xff]
        %v676 = vcombine.high %v670, %v670
        %v677 = vcombine.high %v671, %v671
        %678 = vrot.lane.b32.xlu0 %v670, 110
        %v679 = vpop.permute.xlu0 %678
        %680 = vrot.lane.b32.xlu0 %v676, 110
        %v681 = vpop.permute.xlu0 %680
        %682 = vrot.lane.b32.xlu0 %v671, 110
        %v683 = vpop.permute.xlu0 %682
        %684 = vrot.lane.b32.xlu0 %v677, 110
        %v685 = vpop.permute.xlu0 %684
        %vm686 = vcmask 900096
        %v687 = vsel %vm686, %v679, %v681
        %v688 = vsel %vm686, %v681, %v683
        %v689 = vsel %vm686, %v683, %v685
        %v691 = vsel %vm192, %v673, 0
        %v693 = vsel %vm196, %v687, 0
        %v695 = vsel %vm196, %v688, 0
        %v697 = vsel %vm196, %v689, 0
        %699 = vmatprep.subr.mxu0 %v695
        %700 = vmatpush1.msra.mxu0 %v693
        %701 = vmatprep.subr.mxu0 0.0
        %702 = vmatpush1.msra.mxu0 0.0
        %703 = vmatprep.subr.mxu0 0.0
        %704 = vmatpush1.msra.mxu0 0.0
        %705 = vmatprep.subr.mxu0 0.0
        %706 = vmatpush1.msra.mxu0 0.0
        %707 = vmatprep.subr.mxu0 0.0
        %708 = vmatpush1.msra.mxu0 0.0
        %709 = vmatprep.subr.mxu0 0.0
        %710 = vmatpush1.msra.mxu0 0.0
        %711 = vmatprep.subr.mxu0 0.0
        %712 = vmatpush1.msra.mxu0 0.0
        %713 = vmatprep.subr.mxu0 0.0
        %714 = vmatpush1.msra.mxu0 0.0
        %715 = vmatprep.subr.mxu0 0.0
        %716 = vmatpush1.msra.mxu0 0.0
        %717 = vmatprep.subr.mxu0 0.0
        %718 = vmatpush1.msra.mxu0 0.0
        %719 = vmatprep.subr.mxu0 0.0
        %720 = vmatpush1.msra.mxu0 0.0
        %721 = vmatprep.subr.mxu0 0.0
        %722 = vmatpush1.msra.mxu0 0.0
        %723 = vmatprep.subr.mxu0 0.0
        %724 = vmatpush1.msra.mxu0 0.0
        %725 = vmatprep.subr.mxu0 0.0
        %726 = vmatpush1.msra.mxu0 0.0
        %727 = vmatprep.subr.mxu0 0.0
        %728 = vmatpush1.msra.mxu0 0.0
        %729 = vmatprep.subr.mxu0 0.0
        %730 = vmatpush1.msra.mxu0 0.0
        %731 = vmatprep.subr.mxu0 0.0
        %732 = vmatpush1.msra.mxu0 0.0
        %733 = vmatprep.subr.mxu0 0.0
        %734 = vmatpush1.msra.mxu0 0.0
        %735 = vmatprep.subr.mxu0 0.0
        %736 = vmatpush1.msra.mxu0 0.0
        %737 = vmatprep.subr.mxu0 0.0
        %738 = vmatpush1.msra.mxu0 0.0
        %739 = vmatprep.subr.mxu0 0.0
        %740 = vmatpush1.msra.mxu0 0.0
        %741 = vmatprep.subr.mxu0 0.0
        %742 = vmatpush1.msra.mxu0 0.0
        %743 = vmatprep.subr.mxu0 0.0
        %744 = vmatpush1.msra.mxu0 0.0
        %745 = vmatprep.subr.mxu0 0.0
        %746 = vmatpush1.msra.mxu0 0.0
        %747 = vmatprep.subr.mxu0 0.0
        %748 = vmatpush1.msra.mxu0 0.0
        %749 = vmatprep.subr.mxu0 0.0
        %750 = vmatpush1.msra.mxu0 0.0
        %751 = vmatprep.subr.mxu0 0.0
        %752 = vmatpush1.msra.mxu0 0.0
        %753 = vmatprep.subr.mxu0 0.0
        %754 = vmatpush1.msra.mxu0 0.0
        %755 = vmatprep.subr.mxu0 0.0
        %756 = vmatpush1.msra.mxu0 0.0
        %757 = vmatprep.subr.mxu0 0.0
        %758 = vmatpush1.msra.mxu0 0.0
        %759 = vmatprep.subr.mxu0 0.0
        %760 = vmatpush1.msra.mxu0 0.0
        %761 = vmatprep.subr.mxu0 0.0
        %762 = vmatpush1.msra.mxu0 0.0
        %763 = vmatprep.mubr.f32.mxu0 0.0
        %764 = vmatmul.mubr.f32.gmra.mrb[0].mxu0 %v691
        %v765 = vpop.f32.mrb[0].mxu0
        %v766 = vadd.f32 0.0, %v765
        %v767 = vpop.f32.mrb[0].mxu0
        %v768 = vadd.f32 0.0, %v767
        %769 = vdwg.mxu0
        %770 = vmatprep.subr.mxu0 0.0
        %771 = vmatpush1.msra.mxu0 %v697
        %772 = vmatprep.subr.mxu0 0.0
        %773 = vmatpush1.msra.mxu0 0.0
        %774 = vmatprep.subr.mxu0 0.0
        %775 = vmatpush1.msra.mxu0 0.0
        %776 = vmatprep.subr.mxu0 0.0
        %777 = vmatpush1.msra.mxu0 0.0
        %778 = vmatprep.subr.mxu0 0.0
        %779 = vmatpush1.msra.mxu0 0.0
        %780 = vmatprep.subr.mxu0 0.0
        %781 = vmatpush1.msra.mxu0 0.0
        %782 = vmatprep.subr.mxu0 0.0
        %783 = vmatpush1.msra.mxu0 0.0
        %784 = vmatprep.subr.mxu0 0.0
        %785 = vmatpush1.msra.mxu0 0.0
        %786 = vmatprep.subr.mxu0 0.0
        %787 = vmatpush1.msra.mxu0 0.0
        %788 = vmatprep.subr.mxu0 0.0
        %789 = vmatpush1.msra.mxu0 0.0
        %790 = vmatprep.subr.mxu0 0.0
        %791 = vmatpush1.msra.mxu0 0.0
        %792 = vmatprep.subr.mxu0 0.0
        %793 = vmatpush1.msra.mxu0 0.0
        %794 = vmatprep.subr.mxu0 0.0
        %795 = vmatpush1.msra.mxu0 0.0
        %796 = vmatprep.subr.mxu0 0.0
        %797 = vmatpush1.msra.mxu0 0.0
        %798 = vmatprep.subr.mxu0 0.0
        %799 = vmatpush1.msra.mxu0 0.0
        %800 = vmatprep.subr.mxu0 0.0
        %801 = vmatpush1.msra.mxu0 0.0
        %802 = vmatprep.subr.mxu0 0.0
        %803 = vmatpush1.msra.mxu0 0.0
        %804 = vmatprep.subr.mxu0 0.0
        %805 = vmatpush1.msra.mxu0 0.0
        %806 = vmatprep.subr.mxu0 0.0
        %807 = vmatpush1.msra.mxu0 0.0
        %808 = vmatprep.subr.mxu0 0.0
        %809 = vmatpush1.msra.mxu0 0.0
        %810 = vmatprep.subr.mxu0 0.0
        %811 = vmatpush1.msra.mxu0 0.0
        %812 = vmatprep.subr.mxu0 0.0
        %813 = vmatpush1.msra.mxu0 0.0
        %814 = vmatprep.subr.mxu0 0.0
        %815 = vmatpush1.msra.mxu0 0.0
        %816 = vmatprep.subr.mxu0 0.0
        %817 = vmatpush1.msra.mxu0 0.0
        %818 = vmatprep.subr.mxu0 0.0
        %819 = vmatpush1.msra.mxu0 0.0
        %820 = vmatprep.subr.mxu0 0.0
        %821 = vmatpush1.msra.mxu0 0.0
        %822 = vmatprep.subr.mxu0 0.0
        %823 = vmatpush1.msra.mxu0 0.0
        %824 = vmatprep.subr.mxu0 0.0
        %825 = vmatpush1.msra.mxu0 0.0
        %826 = vmatprep.subr.mxu0 0.0
        %827 = vmatpush1.msra.mxu0 0.0
        %828 = vmatprep.subr.mxu0 0.0
        %829 = vmatpush1.msra.mxu0 0.0
        %830 = vmatprep.subr.mxu0 0.0
        %831 = vmatpush1.msra.mxu0 0.0
        %832 = vmatprep.subr.mxu0 0.0
        %833 = vmatpush1.msra.mxu0 0.0
        %834 = vmatprep.mubr.f32.mxu0 0.0
        %835 = vmatmul.mubr.f32.gmra.mrb[0].mxu0 %v691
        %v836 = vpop.f32.mrb[0].mxu0
        %v837 = vadd.f32 0.0, %v836
        %v838 = vpop.f32.mrb[0].mxu0
        %839 = vdwg.mxu0
        %v840 = vadd.f32 %v667, %v766
        %v841 = vadd.f32 %v668, %v768
        %v842 = vadd.f32 %v669, %v837
        %v843 = vld [vmem:[%s168] sm:$0xff]
        %v844 = vld [vmem:[%s168 + $0x8] sm:$0xff]
        %s845 = scalar_lea.vmem %s1, 32
        %v846 = vld [vmem:[%s845] sm:$0xff]
        %v849 = vcombine.high %v843, %v843
        %v850 = vcombine.high %v844, %v844
        %851 = vrot.lane.b32.xlu0 %v843, 109
        %v852 = vpop.permute.xlu0 %851
        %853 = vrot.lane.b32.xlu0 %v849, 109
        %v854 = vpop.permute.xlu0 %853
        %855 = vrot.lane.b32.xlu0 %v844, 109
        %v856 = vpop.permute.xlu0 %855
        %857 = vrot.lane.b32.xlu0 %v850, 109
        %v858 = vpop.permute.xlu0 %857
        %vm859 = vcmask 891904
        %v860 = vsel %vm859, %v852, %v854
        %v861 = vsel %vm859, %v854, %v856
        %v862 = vsel %vm859, %v856, %v858
        %v864 = vsel %vm192, %v846, 0
        %v866 = vsel %vm196, %v860, 0
        %v868 = vsel %vm196, %v861, 0
        %v870 = vsel %vm196, %v862, 0
        %872 = vmatprep.subr.mxu0 %v868
        %873 = vmatpush1.msra.mxu0 %v866
        %874 = vmatprep.subr.mxu0 0.0
        %875 = vmatpush1.msra.mxu0 0.0
        %876 = vmatprep.subr.mxu0 0.0
        %877 = vmatpush1.msra.mxu0 0.0
        %878 = vmatprep.subr.mxu0 0.0
        %879 = vmatpush1.msra.mxu0 0.0
        %880 = vmatprep.subr.mxu0 0.0
        %881 = vmatpush1.msra.mxu0 0.0
        %882 = vmatprep.subr.mxu0 0.0
        %883 = vmatpush1.msra.mxu0 0.0
        %884 = vmatprep.subr.mxu0 0.0
        %885 = vmatpush1.msra.mxu0 0.0
        %886 = vmatprep.subr.mxu0 0.0
        %887 = vmatpush1.msra.mxu0 0.0
        %888 = vmatprep.subr.mxu0 0.0
        %889 = vmatpush1.msra.mxu0 0.0
        %890 = vmatprep.subr.mxu0 0.0
        %891 = vmatpush1.msra.mxu0 0.0
        %892 = vmatprep.subr.mxu0 0.0
        %893 = vmatpush1.msra.mxu0 0.0
        %894 = vmatprep.subr.mxu0 0.0
        %895 = vmatpush1.msra.mxu0 0.0
        %896 = vmatprep.subr.mxu0 0.0
        %897 = vmatpush1.msra.mxu0 0.0
        %898 = vmatprep.subr.mxu0 0.0
        %899 = vmatpush1.msra.mxu0 0.0
        %900 = vmatprep.subr.mxu0 0.0
        %901 = vmatpush1.msra.mxu0 0.0
        %902 = vmatprep.subr.mxu0 0.0
        %903 = vmatpush1.msra.mxu0 0.0
        %904 = vmatprep.subr.mxu0 0.0
        %905 = vmatpush1.msra.mxu0 0.0
        %906 = vmatprep.subr.mxu0 0.0
        %907 = vmatpush1.msra.mxu0 0.0
        %908 = vmatprep.subr.mxu0 0.0
        %909 = vmatpush1.msra.mxu0 0.0
        %910 = vmatprep.subr.mxu0 0.0
        %911 = vmatpush1.msra.mxu0 0.0
        %912 = vmatprep.subr.mxu0 0.0
        %913 = vmatpush1.msra.mxu0 0.0
        %914 = vmatprep.subr.mxu0 0.0
        %915 = vmatpush1.msra.mxu0 0.0
        %916 = vmatprep.subr.mxu0 0.0
        %917 = vmatpush1.msra.mxu0 0.0
        %918 = vmatprep.subr.mxu0 0.0
        %919 = vmatpush1.msra.mxu0 0.0
        %920 = vmatprep.subr.mxu0 0.0
        %921 = vmatpush1.msra.mxu0 0.0
        %922 = vmatprep.subr.mxu0 0.0
        %923 = vmatpush1.msra.mxu0 0.0
        %924 = vmatprep.subr.mxu0 0.0
        %925 = vmatpush1.msra.mxu0 0.0
        %926 = vmatprep.subr.mxu0 0.0
        %927 = vmatpush1.msra.mxu0 0.0
        %928 = vmatprep.subr.mxu0 0.0
        %929 = vmatpush1.msra.mxu0 0.0
        %930 = vmatprep.subr.mxu0 0.0
        %931 = vmatpush1.msra.mxu0 0.0
        %932 = vmatprep.subr.mxu0 0.0
        %933 = vmatpush1.msra.mxu0 0.0
        %934 = vmatprep.subr.mxu0 0.0
        %935 = vmatpush1.msra.mxu0 0.0
        %936 = vmatprep.mubr.f32.mxu0 0.0
        %937 = vmatmul.mubr.f32.gmra.mrb[0].mxu0 %v864
        %v938 = vpop.f32.mrb[0].mxu0
        %v939 = vadd.f32 0.0, %v938
        %v940 = vpop.f32.mrb[0].mxu0
        %v941 = vadd.f32 0.0, %v940
        %942 = vdwg.mxu0
        %943 = vmatprep.subr.mxu0 0.0
        %944 = vmatpush1.msra.mxu0 %v870
        %945 = vmatprep.subr.mxu0 0.0
        %946 = vmatpush1.msra.mxu0 0.0
        %947 = vmatprep.subr.mxu0 0.0
        %948 = vmatpush1.msra.mxu0 0.0
        %949 = vmatprep.subr.mxu0 0.0
        %950 = vmatpush1.msra.mxu0 0.0
        %951 = vmatprep.subr.mxu0 0.0
        %952 = vmatpush1.msra.mxu0 0.0
        %953 = vmatprep.subr.mxu0 0.0
        %954 = vmatpush1.msra.mxu0 0.0
        %955 = vmatprep.subr.mxu0 0.0
        %956 = vmatpush1.msra.mxu0 0.0
        %957 = vmatprep.subr.mxu0 0.0
        %958 = vmatpush1.msra.mxu0 0.0
        %959 = vmatprep.subr.mxu0 0.0
        %960 = vmatpush1.msra.mxu0 0.0
        %961 = vmatprep.subr.mxu0 0.0
        %962 = vmatpush1.msra.mxu0 0.0
        %963 = vmatprep.subr.mxu0 0.0
        %964 = vmatpush1.msra.mxu0 0.0
        %965 = vmatprep.subr.mxu0 0.0
        %966 = vmatpush1.msra.mxu0 0.0
        %967 = vmatprep.subr.mxu0 0.0
        %968 = vmatpush1.msra.mxu0 0.0
        %969 = vmatprep.subr.mxu0 0.0
        %970 = vmatpush1.msra.mxu0 0.0
        %971 = vmatprep.subr.mxu0 0.0
        %972 = vmatpush1.msra.mxu0 0.0
        %973 = vmatprep.subr.mxu0 0.0
        %974 = vmatpush1.msra.mxu0 0.0
        %975 = vmatprep.subr.mxu0 0.0
        %976 = vmatpush1.msra.mxu0 0.0
        %977 = vmatprep.subr.mxu0 0.0
        %978 = vmatpush1.msra.mxu0 0.0
        %979 = vmatprep.subr.mxu0 0.0
        %980 = vmatpush1.msra.mxu0 0.0
        %981 = vmatprep.subr.mxu0 0.0
        %982 = vmatpush1.msra.mxu0 0.0
        %983 = vmatprep.subr.mxu0 0.0
        %984 = vmatpush1.msra.mxu0 0.0
        %985 = vmatprep.subr.mxu0 0.0
        %986 = vmatpush1.msra.mxu0 0.0
        %987 = vmatprep.subr.mxu0 0.0
        %988 = vmatpush1.msra.mxu0 0.0
        %989 = vmatprep.subr.mxu0 0.0
        %990 = vmatpush1.msra.mxu0 0.0
        %991 = vmatprep.subr.mxu0 0.0
        %992 = vmatpush1.msra.mxu0 0.0
        %993 = vmatprep.subr.mxu0 0.0
        %994 = vmatpush1.msra.mxu0 0.0
        %995 = vmatprep.subr.mxu0 0.0
        %996 = vmatpush1.msra.mxu0 0.0
        %997 = vmatprep.subr.mxu0 0.0
        %998 = vmatpush1.msra.mxu0 0.0
        %999 = vmatprep.subr.mxu0 0.0
        %1000 = vmatpush1.msra.mxu0 0.0
        %1001 = vmatprep.subr.mxu0 0.0
        %1002 = vmatpush1.msra.mxu0 0.0
        %1003 = vmatprep.subr.mxu0 0.0
        %1004 = vmatpush1.msra.mxu0 0.0
        %1005 = vmatprep.subr.mxu0 0.0
        %1006 = vmatpush1.msra.mxu0 0.0
        %1007 = vmatprep.mubr.f32.mxu0 0.0
        %1008 = vmatmul.mubr.f32.gmra.mrb[0].mxu0 %v864
        %v1009 = vpop.f32.mrb[0].mxu0
        %v1010 = vadd.f32 0.0, %v1009
        %v1011 = vpop.f32.mrb[0].mxu0
        %1012 = vdwg.mxu0
        %v1013 = vadd.f32 %v840, %v939
        %v1014 = vadd.f32 %v841, %v941
        %v1015 = vadd.f32 %v842, %v1010
        %v1016 = vld [vmem:[%s168] sm:$0xff]
        %v1017 = vld [vmem:[%s168 + $0x8] sm:$0xff]
        %s1018 = scalar_lea.vmem %s1, 40
        %v1019 = vld [vmem:[%s1018] sm:$0xff]
        %v1022 = vcombine.high %v1016, %v1016
        %v1023 = vcombine.high %v1017, %v1017
        %1024 = vrot.lane.b32.xlu0 %v1016, 108
        %v1025 = vpop.permute.xlu0 %1024
        %1026 = vrot.lane.b32.xlu0 %v1022, 108
        %v1027 = vpop.permute.xlu0 %1026
        %1028 = vrot.lane.b32.xlu0 %v1017, 108
        %v1029 = vpop.permute.xlu0 %1028
        %1030 = vrot.lane.b32.xlu0 %v1023, 108
        %v1031 = vpop.permute.xlu0 %1030
        %vm1032 = vcmask 883712
        %v1033 = vsel %vm1032, %v1025, %v1027
        %v1034 = vsel %vm1032, %v1027, %v1029
        %v1035 = vsel %vm1032, %v1029, %v1031
        %v1037 = vsel %vm192, %v1019, 0
        %v1039 = vsel %vm196, %v1033, 0
        %v1041 = vsel %vm196, %v1034, 0
        %v1043 = vsel %vm196, %v1035, 0
        %1045 = vmatprep.subr.mxu0 %v1041
        %1046 = vmatpush1.msra.mxu0 %v1039
        %1047 = vmatprep.subr.mxu0 0.0
        %1048 = vmatpush1.msra.mxu0 0.0
        %1049 = vmatprep.subr.mxu0 0.0
        %1050 = vmatpush1.msra.mxu0 0.0
        %1051 = vmatprep.subr.mxu0 0.0
        %1052 = vmatpush1.msra.mxu0 0.0
        %1053 = vmatprep.subr.mxu0 0.0
        %1054 = vmatpush1.msra.mxu0 0.0
        %1055 = vmatprep.subr.mxu0 0.0
        %1056 = vmatpush1.msra.mxu0 0.0
        %1057 = vmatprep.subr.mxu0 0.0
        %1058 = vmatpush1.msra.mxu0 0.0
        %1059 = vmatprep.subr.mxu0 0.0
        %1060 = vmatpush1.msra.mxu0 0.0
        %1061 = vmatprep.subr.mxu0 0.0
        %1062 = vmatpush1.msra.mxu0 0.0
        %1063 = vmatprep.subr.mxu0 0.0
        %1064 = vmatpush1.msra.mxu0 0.0
        %1065 = vmatprep.subr.mxu0 0.0
        %1066 = vmatpush1.msra.mxu0 0.0
        %1067 = vmatprep.subr.mxu0 0.0
        %1068 = vmatpush1.msra.mxu0 0.0
        %1069 = vmatprep.subr.mxu0 0.0
        %1070 = vmatpush1.msra.mxu0 0.0
        %1071 = vmatprep.subr.mxu0 0.0
        %1072 = vmatpush1.msra.mxu0 0.0
        %1073 = vmatprep.subr.mxu0 0.0
        %1074 = vmatpush1.msra.mxu0 0.0
        %1075 = vmatprep.subr.mxu0 0.0
        %1076 = vmatpush1.msra.mxu0 0.0
        %1077 = vmatprep.subr.mxu0 0.0
        %1078 = vmatpush1.msra.mxu0 0.0
        %1079 = vmatprep.subr.mxu0 0.0
        %1080 = vmatpush1.msra.mxu0 0.0
        %1081 = vmatprep.subr.mxu0 0.0
        %1082 = vmatpush1.msra.mxu0 0.0
        %1083 = vmatprep.subr.mxu0 0.0
        %1084 = vmatpush1.msra.mxu0 0.0
        %1085 = vmatprep.subr.mxu0 0.0
        %1086 = vmatpush1.msra.mxu0 0.0
        %1087 = vmatprep.subr.mxu0 0.0
        %1088 = vmatpush1.msra.mxu0 0.0
        %1089 = vmatprep.subr.mxu0 0.0
        %1090 = vmatpush1.msra.mxu0 0.0
        %1091 = vmatprep.subr.mxu0 0.0
        %1092 = vmatpush1.msra.mxu0 0.0
        %1093 = vmatprep.subr.mxu0 0.0
        %1094 = vmatpush1.msra.mxu0 0.0
        %1095 = vmatprep.subr.mxu0 0.0
        %1096 = vmatpush1.msra.mxu0 0.0
        %1097 = vmatprep.subr.mxu0 0.0
        %1098 = vmatpush1.msra.mxu0 0.0
        %1099 = vmatprep.subr.mxu0 0.0
        %1100 = vmatpush1.msra.mxu0 0.0
        %1101 = vmatprep.subr.mxu0 0.0
        %1102 = vmatpush1.msra.mxu0 0.0
        %1103 = vmatprep.subr.mxu0 0.0
        %1104 = vmatpush1.msra.mxu0 0.0
        %1105 = vmatprep.subr.mxu0 0.0
        %1106 = vmatpush1.msra.mxu0 0.0
        %1107 = vmatprep.subr.mxu0 0.0
        %1108 = vmatpush1.msra.mxu0 0.0
        %1109 = vmatprep.mubr.f32.mxu0 0.0
        %1110 = vmatmul.mubr.f32.gmra.mrb[0].mxu0 %v1037
        %v1111 = vpop.f32.mrb[0].mxu0
        %v1112 = vadd.f32 0.0, %v1111
        %v1113 = vpop.f32.mrb[0].mxu0
        %v1114 = vadd.f32 0.0, %v1113
        %1115 = vdwg.mxu0
        %1116 = vmatprep.subr.mxu0 0.0
        %1117 = vmatpush1.msra.mxu0 %v1043
        %1118 = vmatprep.subr.mxu0 0.0
        %1119 = vmatpush1.msra.mxu0 0.0
        %1120 = vmatprep.subr.mxu0 0.0
        %1121 = vmatpush1.msra.mxu0 0.0
        %1122 = vmatprep.subr.mxu0 0.0
        %1123 = vmatpush1.msra.mxu0 0.0
        %1124 = vmatprep.subr.mxu0 0.0
        %1125 = vmatpush1.msra.mxu0 0.0
        %1126 = vmatprep.subr.mxu0 0.0
        %1127 = vmatpush1.msra.mxu0 0.0
        %1128 = vmatprep.subr.mxu0 0.0
        %1129 = vmatpush1.msra.mxu0 0.0
        %1130 = vmatprep.subr.mxu0 0.0
        %1131 = vmatpush1.msra.mxu0 0.0
        %1132 = vmatprep.subr.mxu0 0.0
        %1133 = vmatpush1.msra.mxu0 0.0
        %1134 = vmatprep.subr.mxu0 0.0
        %1135 = vmatpush1.msra.mxu0 0.0
        %1136 = vmatprep.subr.mxu0 0.0
        %1137 = vmatpush1.msra.mxu0 0.0
        %1138 = vmatprep.subr.mxu0 0.0
        %1139 = vmatpush1.msra.mxu0 0.0
        %1140 = vmatprep.subr.mxu0 0.0
        %1141 = vmatpush1.msra.mxu0 0.0
        %1142 = vmatprep.subr.mxu0 0.0
        %1143 = vmatpush1.msra.mxu0 0.0
        %1144 = vmatprep.subr.mxu0 0.0
        %1145 = vmatpush1.msra.mxu0 0.0
        %1146 = vmatprep.subr.mxu0 0.0
        %1147 = vmatpush1.msra.mxu0 0.0
        %1148 = vmatprep.subr.mxu0 0.0
        %1149 = vmatpush1.msra.mxu0 0.0
        %1150 = vmatprep.subr.mxu0 0.0
        %1151 = vmatpush1.msra.mxu0 0.0
        %1152 = vmatprep.subr.mxu0 0.0
        %1153 = vmatpush1.msra.mxu0 0.0
        %1154 = vmatprep.subr.mxu0 0.0
        %1155 = vmatpush1.msra.mxu0 0.0
        %1156 = vmatprep.subr.mxu0 0.0
        %1157 = vmatpush1.msra.mxu0 0.0
        %1158 = vmatprep.subr.mxu0 0.0
        %1159 = vmatpush1.msra.mxu0 0.0
        %1160 = vmatprep.subr.mxu0 0.0
        %1161 = vmatpush1.msra.mxu0 0.0
        %1162 = vmatprep.subr.mxu0 0.0
        %1163 = vmatpush1.msra.mxu0 0.0
        %1164 = vmatprep.subr.mxu0 0.0
        %1165 = vmatpush1.msra.mxu0 0.0
        %1166 = vmatprep.subr.mxu0 0.0
        %1167 = vmatpush1.msra.mxu0 0.0
        %1168 = vmatprep.subr.mxu0 0.0
        %1169 = vmatpush1.msra.mxu0 0.0
        %1170 = vmatprep.subr.mxu0 0.0
        %1171 = vmatpush1.msra.mxu0 0.0
        %1172 = vmatprep.subr.mxu0 0.0
        %1173 = vmatpush1.msra.mxu0 0.0
        %1174 = vmatprep.subr.mxu0 0.0
        %1175 = vmatpush1.msra.mxu0 0.0
        %1176 = vmatprep.subr.mxu0 0.0
        %1177 = vmatpush1.msra.mxu0 0.0
        %1178 = vmatprep.subr.mxu0 0.0
        %1179 = vmatpush1.msra.mxu0 0.0
        %1180 = vmatprep.mubr.f32.mxu0 0.0
        %1181 = vmatmul.mubr.f32.gmra.mrb[0].mxu0 %v1037
        %v1182 = vpop.f32.mrb[0].mxu0
        %v1183 = vadd.f32 0.0, %v1182
        %v1184 = vpop.f32.mrb[0].mxu0
        %1185 = vdwg.mxu0
        %v1186 = vadd.f32 %v1013, %v1112
        %v1187 = vadd.f32 %v1014, %v1114
        %v1188 = vadd.f32 %v1015, %v1183
        %v1189 = vld [vmem:[%s168] sm:$0xff]
        %v1190 = vld [vmem:[%s168 + $0x8] sm:$0xff]
        %s1191 = scalar_lea.vmem %s1, 48
        %v1192 = vld [vmem:[%s1191] sm:$0xff]
        %v1195 = vcombine.high %v1189, %v1189
        %v1196 = vcombine.high %v1190, %v1190
        %1197 = vrot.lane.b32.xlu0 %v1189, 92
        %v1198 = vpop.permute.xlu0 %1197
        %1199 = vrot.lane.b32.xlu0 %v1195, 92
        %v1200 = vpop.permute.xlu0 %1199
        %1201 = vrot.lane.b32.xlu0 %v1190, 92
        %v1202 = vpop.permute.xlu0 %1201
        %1203 = vrot.lane.b32.xlu0 %v1196, 92
        %v1204 = vpop.permute.xlu0 %1203
        %vm1205 = vcmask 752640
        %v1206 = vsel %vm1205, %v1198, %v1200
        %v1207 = vsel %vm1205, %v1200, %v1202
        %v1208 = vsel %vm1205, %v1202, %v1204
        %v1210 = vsel %vm192, %v1192, 0
        %v1212 = vsel %vm196, %v1206, 0
        %v1214 = vsel %vm196, %v1207, 0
        %v1216 = vsel %vm196, %v1208, 0
        %1218 = vmatprep.subr.mxu0 %v1214
        %1219 = vmatpush1.msra.mxu0 %v1212
        %1220 = vmatprep.subr.mxu0 0.0
        %1221 = vmatpush1.msra.mxu0 0.0
        %1222 = vmatprep.subr.mxu0 0.0
        %1223 = vmatpush1.msra.mxu0 0.0
        %1224 = vmatprep.subr.mxu0 0.0
        %1225 = vmatpush1.msra.mxu0 0.0
        %1226 = vmatprep.subr.mxu0 0.0
        %1227 = vmatpush1.msra.mxu0 0.0
        %1228 = vmatprep.subr.mxu0 0.0
        %1229 = vmatpush1.msra.mxu0 0.0
        %1230 = vmatprep.subr.mxu0 0.0
        %1231 = vmatpush1.msra.mxu0 0.0
        %1232 = vmatprep.subr.mxu0 0.0
        %1233 = vmatpush1.msra.mxu0 0.0
        %1234 = vmatprep.subr.mxu0 0.0
        %1235 = vmatpush1.msra.mxu0 0.0
        %1236 = vmatprep.subr.mxu0 0.0
        %1237 = vmatpush1.msra.mxu0 0.0
        %1238 = vmatprep.subr.mxu0 0.0
        %1239 = vmatpush1.msra.mxu0 0.0
        %1240 = vmatprep.subr.mxu0 0.0
        %1241 = vmatpush1.msra.mxu0 0.0
        %1242 = vmatprep.subr.mxu0 0.0
        %1243 = vmatpush1.msra.mxu0 0.0
        %1244 = vmatprep.subr.mxu0 0.0
        %1245 = vmatpush1.msra.mxu0 0.0
        %1246 = vmatprep.subr.mxu0 0.0
        %1247 = vmatpush1.msra.mxu0 0.0
        %1248 = vmatprep.subr.mxu0 0.0
        %1249 = vmatpush1.msra.mxu0 0.0
        %1250 = vmatprep.subr.mxu0 0.0
        %1251 = vmatpush1.msra.mxu0 0.0
        %1252 = vmatprep.subr.mxu0 0.0
        %1253 = vmatpush1.msra.mxu0 0.0
        %1254 = vmatprep.subr.mxu0 0.0
        %1255 = vmatpush1.msra.mxu0 0.0
        %1256 = vmatprep.subr.mxu0 0.0
        %1257 = vmatpush1.msra.mxu0 0.0
        %1258 = vmatprep.subr.mxu0 0.0
        %1259 = vmatpush1.msra.mxu0 0.0
        %1260 = vmatprep.subr.mxu0 0.0
        %1261 = vmatpush1.msra.mxu0 0.0
        %1262 = vmatprep.subr.mxu0 0.0
        %1263 = vmatpush1.msra.mxu0 0.0
        %1264 = vmatprep.subr.mxu0 0.0
        %1265 = vmatpush1.msra.mxu0 0.0
        %1266 = vmatprep.subr.mxu0 0.0
        %1267 = vmatpush1.msra.mxu0 0.0
        %1268 = vmatprep.subr.mxu0 0.0
        %1269 = vmatpush1.msra.mxu0 0.0
        %1270 = vmatprep.subr.mxu0 0.0
        %1271 = vmatpush1.msra.mxu0 0.0
        %1272 = vmatprep.subr.mxu0 0.0
        %1273 = vmatpush1.msra.mxu0 0.0
        %1274 = vmatprep.subr.mxu0 0.0
        %1275 = vmatpush1.msra.mxu0 0.0
        %1276 = vmatprep.subr.mxu0 0.0
        %1277 = vmatpush1.msra.mxu0 0.0
        %1278 = vmatprep.subr.mxu0 0.0
        %1279 = vmatpush1.msra.mxu0 0.0
        %1280 = vmatprep.subr.mxu0 0.0
        %1281 = vmatpush1.msra.mxu0 0.0
        %1282 = vmatprep.mubr.f32.mxu0 0.0
        %1283 = vmatmul.mubr.f32.gmra.mrb[0].mxu0 %v1210
        %v1284 = vpop.f32.mrb[0].mxu0
        %v1285 = vadd.f32 0.0, %v1284
        %v1286 = vpop.f32.mrb[0].mxu0
        %v1287 = vadd.f32 0.0, %v1286
        %1288 = vdwg.mxu0
        %1289 = vmatprep.subr.mxu0 0.0
        %1290 = vmatpush1.msra.mxu0 %v1216
        %1291 = vmatprep.subr.mxu0 0.0
        %1292 = vmatpush1.msra.mxu0 0.0
        %1293 = vmatprep.subr.mxu0 0.0
        %1294 = vmatpush1.msra.mxu0 0.0
        %1295 = vmatprep.subr.mxu0 0.0
        %1296 = vmatpush1.msra.mxu0 0.0
        %1297 = vmatprep.subr.mxu0 0.0
        %1298 = vmatpush1.msra.mxu0 0.0
        %1299 = vmatprep.subr.mxu0 0.0
        %1300 = vmatpush1.msra.mxu0 0.0
        %1301 = vmatprep.subr.mxu0 0.0
        %1302 = vmatpush1.msra.mxu0 0.0
        %1303 = vmatprep.subr.mxu0 0.0
        %1304 = vmatpush1.msra.mxu0 0.0
        %1305 = vmatprep.subr.mxu0 0.0
        %1306 = vmatpush1.msra.mxu0 0.0
        %1307 = vmatprep.subr.mxu0 0.0
        %1308 = vmatpush1.msra.mxu0 0.0
        %1309 = vmatprep.subr.mxu0 0.0
        %1310 = vmatpush1.msra.mxu0 0.0
        %1311 = vmatprep.subr.mxu0 0.0
        %1312 = vmatpush1.msra.mxu0 0.0
        %1313 = vmatprep.subr.mxu0 0.0
        %1314 = vmatpush1.msra.mxu0 0.0
        %1315 = vmatprep.subr.mxu0 0.0
        %1316 = vmatpush1.msra.mxu0 0.0
        %1317 = vmatprep.subr.mxu0 0.0
        %1318 = vmatpush1.msra.mxu0 0.0
        %1319 = vmatprep.subr.mxu0 0.0
        %1320 = vmatpush1.msra.mxu0 0.0
        %1321 = vmatprep.subr.mxu0 0.0
        %1322 = vmatpush1.msra.mxu0 0.0
        %1323 = vmatprep.subr.mxu0 0.0
        %1324 = vmatpush1.msra.mxu0 0.0
        %1325 = vmatprep.subr.mxu0 0.0
        %1326 = vmatpush1.msra.mxu0 0.0
        %1327 = vmatprep.subr.mxu0 0.0
        %1328 = vmatpush1.msra.mxu0 0.0
        %1329 = vmatprep.subr.mxu0 0.0
        %1330 = vmatpush1.msra.mxu0 0.0
        %1331 = vmatprep.subr.mxu0 0.0
        %1332 = vmatpush1.msra.mxu0 0.0
        %1333 = vmatprep.subr.mxu0 0.0
        %1334 = vmatpush1.msra.mxu0 0.0
        %1335 = vmatprep.subr.mxu0 0.0
        %1336 = vmatpush1.msra.mxu0 0.0
        %1337 = vmatprep.subr.mxu0 0.0
        %1338 = vmatpush1.msra.mxu0 0.0
        %1339 = vmatprep.subr.mxu0 0.0
        %1340 = vmatpush1.msra.mxu0 0.0
        %1341 = vmatprep.subr.mxu0 0.0
        %1342 = vmatpush1.msra.mxu0 0.0
        %1343 = vmatprep.subr.mxu0 0.0
        %1344 = vmatpush1.msra.mxu0 0.0
        %1345 = vmatprep.subr.mxu0 0.0
        %1346 = vmatpush1.msra.mxu0 0.0
        %1347 = vmatprep.subr.mxu0 0.0
        %1348 = vmatpush1.msra.mxu0 0.0
        %1349 = vmatprep.subr.mxu0 0.0
        %1350 = vmatpush1.msra.mxu0 0.0
        %1351 = vmatprep.subr.mxu0 0.0
        %1352 = vmatpush1.msra.mxu0 0.0
        %1353 = vmatprep.mubr.f32.mxu0 0.0
        %1354 = vmatmul.mubr.f32.gmra.mrb[0].mxu0 %v1210
        %v1355 = vpop.f32.mrb[0].mxu0
        %v1356 = vadd.f32 0.0, %v1355
        %v1357 = vpop.f32.mrb[0].mxu0
        %1358 = vdwg.mxu0
        %v1359 = vadd.f32 %v1186, %v1285
        %v1360 = vadd.f32 %v1187, %v1287
        %v1361 = vadd.f32 %v1188, %v1356
        %v1362 = vld [vmem:[%s168] sm:$0xff]
        %v1363 = vld [vmem:[%s168 + $0x8] sm:$0xff]
        %s1364 = scalar_lea.vmem %s1, 56
        %v1365 = vld [vmem:[%s1364] sm:$0xff]
        %v1368 = vcombine.high %v1362, %v1362
        %v1369 = vcombine.high %v1363, %v1363
        %1370 = vrot.lane.b32.xlu0 %v1362, 91
        %v1371 = vpop.permute.xlu0 %1370
        %1372 = vrot.lane.b32.xlu0 %v1368, 91
        %v1373 = vpop.permute.xlu0 %1372
        %1374 = vrot.lane.b32.xlu0 %v1363, 91
        %v1375 = vpop.permute.xlu0 %1374
        %1376 = vrot.lane.b32.xlu0 %v1369, 91
        %v1377 = vpop.permute.xlu0 %1376
        %vm1378 = vcmask 744448
        %v1379 = vsel %vm1378, %v1371, %v1373
        %v1380 = vsel %vm1378, %v1373, %v1375
        %v1381 = vsel %vm1378, %v1375, %v1377
        %v1383 = vsel %vm192, %v1365, 0
        %v1385 = vsel %vm196, %v1379, 0
        %v1387 = vsel %vm196, %v1380, 0
        %v1389 = vsel %vm196, %v1381, 0
        %1391 = vmatprep.subr.mxu0 %v1387
        %1392 = vmatpush1.msra.mxu0 %v1385
        %1393 = vmatprep.subr.mxu0 0.0
        %1394 = vmatpush1.msra.mxu0 0.0
        %1395 = vmatprep.subr.mxu0 0.0
        %1396 = vmatpush1.msra.mxu0 0.0
        %1397 = vmatprep.subr.mxu0 0.0
        %1398 = vmatpush1.msra.mxu0 0.0
        %1399 = vmatprep.subr.mxu0 0.0
        %1400 = vmatpush1.msra.mxu0 0.0
        %1401 = vmatprep.subr.mxu0 0.0
        %1402 = vmatpush1.msra.mxu0 0.0
        %1403 = vmatprep.subr.mxu0 0.0
        %1404 = vmatpush1.msra.mxu0 0.0
        %1405 = vmatprep.subr.mxu0 0.0
        %1406 = vmatpush1.msra.mxu0 0.0
        %1407 = vmatprep.subr.mxu0 0.0
        %1408 = vmatpush1.msra.mxu0 0.0
        %1409 = vmatprep.subr.mxu0 0.0
        %1410 = vmatpush1.msra.mxu0 0.0
        %1411 = vmatprep.subr.mxu0 0.0
        %1412 = vmatpush1.msra.mxu0 0.0
        %1413 = vmatprep.subr.mxu0 0.0
        %1414 = vmatpush1.msra.mxu0 0.0
        %1415 = vmatprep.subr.mxu0 0.0
        %1416 = vmatpush1.msra.mxu0 0.0
        %1417 = vmatprep.subr.mxu0 0.0
        %1418 = vmatpush1.msra.mxu0 0.0
        %1419 = vmatprep.subr.mxu0 0.0
        %1420 = vmatpush1.msra.mxu0 0.0
        %1421 = vmatprep.subr.mxu0 0.0
        %1422 = vmatpush1.msra.mxu0 0.0
        %1423 = vmatprep.subr.mxu0 0.0
        %1424 = vmatpush1.msra.mxu0 0.0
        %1425 = vmatprep.subr.mxu0 0.0
        %1426 = vmatpush1.msra.mxu0 0.0
        %1427 = vmatprep.subr.mxu0 0.0
        %1428 = vmatpush1.msra.mxu0 0.0
        %1429 = vmatprep.subr.mxu0 0.0
        %1430 = vmatpush1.msra.mxu0 0.0
        %1431 = vmatprep.subr.mxu0 0.0
        %1432 = vmatpush1.msra.mxu0 0.0
        %1433 = vmatprep.subr.mxu0 0.0
        %1434 = vmatpush1.msra.mxu0 0.0
        %1435 = vmatprep.subr.mxu0 0.0
        %1436 = vmatpush1.msra.mxu0 0.0
        %1437 = vmatprep.subr.mxu0 0.0
        %1438 = vmatpush1.msra.mxu0 0.0
        %1439 = vmatprep.subr.mxu0 0.0
        %1440 = vmatpush1.msra.mxu0 0.0
        %1441 = vmatprep.subr.mxu0 0.0
        %1442 = vmatpush1.msra.mxu0 0.0
        %1443 = vmatprep.subr.mxu0 0.0
        %1444 = vmatpush1.msra.mxu0 0.0
        %1445 = vmatprep.subr.mxu0 0.0
        %1446 = vmatpush1.msra.mxu0 0.0
        %1447 = vmatprep.subr.mxu0 0.0
        %1448 = vmatpush1.msra.mxu0 0.0
        %1449 = vmatprep.subr.mxu0 0.0
        %1450 = vmatpush1.msra.mxu0 0.0
        %1451 = vmatprep.subr.mxu0 0.0
        %1452 = vmatpush1.msra.mxu0 0.0
        %1453 = vmatprep.subr.mxu0 0.0
        %1454 = vmatpush1.msra.mxu0 0.0
        %1455 = vmatprep.mubr.f32.mxu0 0.0
        %1456 = vmatmul.mubr.f32.gmra.mrb[0].mxu0 %v1383
        %v1457 = vpop.f32.mrb[0].mxu0
        %v1458 = vadd.f32 0.0, %v1457
        %v1459 = vpop.f32.mrb[0].mxu0
        %v1460 = vadd.f32 0.0, %v1459
        %1461 = vdwg.mxu0
        %1462 = vmatprep.subr.mxu0 0.0
        %1463 = vmatpush1.msra.mxu0 %v1389
        %1464 = vmatprep.subr.mxu0 0.0
        %1465 = vmatpush1.msra.mxu0 0.0
        %1466 = vmatprep.subr.mxu0 0.0
        %1467 = vmatpush1.msra.mxu0 0.0
        %1468 = vmatprep.subr.mxu0 0.0
        %1469 = vmatpush1.msra.mxu0 0.0
        %1470 = vmatprep.subr.mxu0 0.0
        %1471 = vmatpush1.msra.mxu0 0.0
        %1472 = vmatprep.subr.mxu0 0.0
        %1473 = vmatpush1.msra.mxu0 0.0
        %1474 = vmatprep.subr.mxu0 0.0
        %1475 = vmatpush1.msra.mxu0 0.0
        %1476 = vmatprep.subr.mxu0 0.0
        %1477 = vmatpush1.msra.mxu0 0.0
        %1478 = vmatprep.subr.mxu0 0.0
        %1479 = vmatpush1.msra.mxu0 0.0
        %1480 = vmatprep.subr.mxu0 0.0
        %1481 = vmatpush1.msra.mxu0 0.0
        %1482 = vmatprep.subr.mxu0 0.0
        %1483 = vmatpush1.msra.mxu0 0.0
        %1484 = vmatprep.subr.mxu0 0.0
        %1485 = vmatpush1.msra.mxu0 0.0
        %1486 = vmatprep.subr.mxu0 0.0
        %1487 = vmatpush1.msra.mxu0 0.0
        %1488 = vmatprep.subr.mxu0 0.0
        %1489 = vmatpush1.msra.mxu0 0.0
        %1490 = vmatprep.subr.mxu0 0.0
        %1491 = vmatpush1.msra.mxu0 0.0
        %1492 = vmatprep.subr.mxu0 0.0
        %1493 = vmatpush1.msra.mxu0 0.0
        %1494 = vmatprep.subr.mxu0 0.0
        %1495 = vmatpush1.msra.mxu0 0.0
        %1496 = vmatprep.subr.mxu0 0.0
        %1497 = vmatpush1.msra.mxu0 0.0
        %1498 = vmatprep.subr.mxu0 0.0
        %1499 = vmatpush1.msra.mxu0 0.0
        %1500 = vmatprep.subr.mxu0 0.0
        %1501 = vmatpush1.msra.mxu0 0.0
        %1502 = vmatprep.subr.mxu0 0.0
        %1503 = vmatpush1.msra.mxu0 0.0
        %1504 = vmatprep.subr.mxu0 0.0
        %1505 = vmatpush1.msra.mxu0 0.0
        %1506 = vmatprep.subr.mxu0 0.0
        %1507 = vmatpush1.msra.mxu0 0.0
        %1508 = vmatprep.subr.mxu0 0.0
        %1509 = vmatpush1.msra.mxu0 0.0
        %1510 = vmatprep.subr.mxu0 0.0
        %1511 = vmatpush1.msra.mxu0 0.0
        %1512 = vmatprep.subr.mxu0 0.0
        %1513 = vmatpush1.msra.mxu0 0.0
        %1514 = vmatprep.subr.mxu0 0.0
        %1515 = vmatpush1.msra.mxu0 0.0
        %1516 = vmatprep.subr.mxu0 0.0
        %1517 = vmatpush1.msra.mxu0 0.0
        %1518 = vmatprep.subr.mxu0 0.0
        %1519 = vmatpush1.msra.mxu0 0.0
        %1520 = vmatprep.subr.mxu0 0.0
        %1521 = vmatpush1.msra.mxu0 0.0
        %1522 = vmatprep.subr.mxu0 0.0
        %1523 = vmatpush1.msra.mxu0 0.0
        %1524 = vmatprep.subr.mxu0 0.0
        %1525 = vmatpush1.msra.mxu0 0.0
        %1526 = vmatprep.mubr.f32.mxu0 0.0
        %1527 = vmatmul.mubr.f32.gmra.mrb[0].mxu0 %v1383
        %v1528 = vpop.f32.mrb[0].mxu0
        %v1529 = vadd.f32 0.0, %v1528
        %v1530 = vpop.f32.mrb[0].mxu0
        %1531 = vdwg.mxu0
        %v1532 = vadd.f32 %v1359, %v1458
        %v1533 = vadd.f32 %v1360, %v1460
        %v1534 = vadd.f32 %v1361, %v1529
        %v1535 = vld [vmem:[%s168] sm:$0xff]
        %v1536 = vld [vmem:[%s168 + $0x8] sm:$0xff]
        %s1537 = scalar_lea.vmem %s1, 64
        %v1538 = vld [vmem:[%s1537] sm:$0xff]
        %v1541 = vcombine.high %v1535, %v1535
        %v1542 = vcombine.high %v1536, %v1536
        %1543 = vrot.lane.b32.xlu0 %v1535, 90
        %v1544 = vpop.permute.xlu0 %1543
        %1545 = vrot.lane.b32.xlu0 %v1541, 90
        %v1546 = vpop.permute.xlu0 %1545
        %1547 = vrot.lane.b32.xlu0 %v1536, 90
        %v1548 = vpop.permute.xlu0 %1547
        %1549 = vrot.lane.b32.xlu0 %v1542, 90
        %v1550 = vpop.permute.xlu0 %1549
        %vm1551 = vcmask 736256
        %v1552 = vsel %vm1551, %v1544, %v1546
        %v1553 = vsel %vm1551, %v1546, %v1548
        %v1554 = vsel %vm1551, %v1548, %v1550
        %v1556 = vsel %vm192, %v1538, 0
        %v1558 = vsel %vm196, %v1552, 0
        %v1560 = vsel %vm196, %v1553, 0
        %v1562 = vsel %vm196, %v1554, 0
        %1564 = vmatprep.subr.mxu0 %v1560
        %1565 = vmatpush1.msra.mxu0 %v1558
        %1566 = vmatprep.subr.mxu0 0.0
        %1567 = vmatpush1.msra.mxu0 0.0
        %1568 = vmatprep.subr.mxu0 0.0
        %1569 = vmatpush1.msra.mxu0 0.0
        %1570 = vmatprep.subr.mxu0 0.0
        %1571 = vmatpush1.msra.mxu0 0.0
        %1572 = vmatprep.subr.mxu0 0.0
        %1573 = vmatpush1.msra.mxu0 0.0
        %1574 = vmatprep.subr.mxu0 0.0
        %1575 = vmatpush1.msra.mxu0 0.0
        %1576 = vmatprep.subr.mxu0 0.0
        %1577 = vmatpush1.msra.mxu0 0.0
        %1578 = vmatprep.subr.mxu0 0.0
        %1579 = vmatpush1.msra.mxu0 0.0
        %1580 = vmatprep.subr.mxu0 0.0
        %1581 = vmatpush1.msra.mxu0 0.0
        %1582 = vmatprep.subr.mxu0 0.0
        %1583 = vmatpush1.msra.mxu0 0.0
        %1584 = vmatprep.subr.mxu0 0.0
        %1585 = vmatpush1.msra.mxu0 0.0
        %1586 = vmatprep.subr.mxu0 0.0
        %1587 = vmatpush1.msra.mxu0 0.0
        %1588 = vmatprep.subr.mxu0 0.0
        %1589 = vmatpush1.msra.mxu0 0.0
        %1590 = vmatprep.subr.mxu0 0.0
        %1591 = vmatpush1.msra.mxu0 0.0
        %1592 = vmatprep.subr.mxu0 0.0
        %1593 = vmatpush1.msra.mxu0 0.0
        %1594 = vmatprep.subr.mxu0 0.0
        %1595 = vmatpush1.msra.mxu0 0.0
        %1596 = vmatprep.subr.mxu0 0.0
        %1597 = vmatpush1.msra.mxu0 0.0
        %1598 = vmatprep.subr.mxu0 0.0
        %1599 = vmatpush1.msra.mxu0 0.0
        %1600 = vmatprep.subr.mxu0 0.0
        %1601 = vmatpush1.msra.mxu0 0.0
        %1602 = vmatprep.subr.mxu0 0.0
        %1603 = vmatpush1.msra.mxu0 0.0
        %1604 = vmatprep.subr.mxu0 0.0
        %1605 = vmatpush1.msra.mxu0 0.0
        %1606 = vmatprep.subr.mxu0 0.0
        %1607 = vmatpush1.msra.mxu0 0.0
        %1608 = vmatprep.subr.mxu0 0.0
        %1609 = vmatpush1.msra.mxu0 0.0
        %1610 = vmatprep.subr.mxu0 0.0
        %1611 = vmatpush1.msra.mxu0 0.0
        %1612 = vmatprep.subr.mxu0 0.0
        %1613 = vmatpush1.msra.mxu0 0.0
        %1614 = vmatprep.subr.mxu0 0.0
        %1615 = vmatpush1.msra.mxu0 0.0
        %1616 = vmatprep.subr.mxu0 0.0
        %1617 = vmatpush1.msra.mxu0 0.0
        %1618 = vmatprep.subr.mxu0 0.0
        %1619 = vmatpush1.msra.mxu0 0.0
        %1620 = vmatprep.subr.mxu0 0.0
        %1621 = vmatpush1.msra.mxu0 0.0
        %1622 = vmatprep.subr.mxu0 0.0
        %1623 = vmatpush1.msra.mxu0 0.0
        %1624 = vmatprep.subr.mxu0 0.0
        %1625 = vmatpush1.msra.mxu0 0.0
        %1626 = vmatprep.subr.mxu0 0.0
        %1627 = vmatpush1.msra.mxu0 0.0
        %1628 = vmatprep.mubr.f32.mxu0 0.0
        %1629 = vmatmul.mubr.f32.gmra.mrb[0].mxu0 %v1556
        %v1630 = vpop.f32.mrb[0].mxu0
        %v1631 = vadd.f32 0.0, %v1630
        %v1632 = vpop.f32.mrb[0].mxu0
        %v1633 = vadd.f32 0.0, %v1632
        %1634 = vdwg.mxu0
        %1635 = vmatprep.subr.mxu0 0.0
        %1636 = vmatpush1.msra.mxu0 %v1562
        %1637 = vmatprep.subr.mxu0 0.0
        %1638 = vmatpush1.msra.mxu0 0.0
        %1639 = vmatprep.subr.mxu0 0.0
        %1640 = vmatpush1.msra.mxu0 0.0
        %1641 = vmatprep.subr.mxu0 0.0
        %1642 = vmatpush1.msra.mxu0 0.0
        %1643 = vmatprep.subr.mxu0 0.0
        %1644 = vmatpush1.msra.mxu0 0.0
        %1645 = vmatprep.subr.mxu0 0.0
        %1646 = vmatpush1.msra.mxu0 0.0
        %1647 = vmatprep.subr.mxu0 0.0
        %1648 = vmatpush1.msra.mxu0 0.0
        %1649 = vmatprep.subr.mxu0 0.0
        %1650 = vmatpush1.msra.mxu0 0.0
        %1651 = vmatprep.subr.mxu0 0.0
        %1652 = vmatpush1.msra.mxu0 0.0
        %1653 = vmatprep.subr.mxu0 0.0
        %1654 = vmatpush1.msra.mxu0 0.0
        %1655 = vmatprep.subr.mxu0 0.0
        %1656 = vmatpush1.msra.mxu0 0.0
        %1657 = vmatprep.subr.mxu0 0.0
        %1658 = vmatpush1.msra.mxu0 0.0
        %1659 = vmatprep.subr.mxu0 0.0
        %1660 = vmatpush1.msra.mxu0 0.0
        %1661 = vmatprep.subr.mxu0 0.0
        %1662 = vmatpush1.msra.mxu0 0.0
        %1663 = vmatprep.subr.mxu0 0.0
        %1664 = vmatpush1.msra.mxu0 0.0
        %1665 = vmatprep.subr.mxu0 0.0
        %1666 = vmatpush1.msra.mxu0 0.0
        %1667 = vmatprep.subr.mxu0 0.0
        %1668 = vmatpush1.msra.mxu0 0.0
        %1669 = vmatprep.subr.mxu0 0.0
        %1670 = vmatpush1.msra.mxu0 0.0
        %1671 = vmatprep.subr.mxu0 0.0
        %1672 = vmatpush1.msra.mxu0 0.0
        %1673 = vmatprep.subr.mxu0 0.0
        %1674 = vmatpush1.msra.mxu0 0.0
        %1675 = vmatprep.subr.mxu0 0.0
        %1676 = vmatpush1.msra.mxu0 0.0
        %1677 = vmatprep.subr.mxu0 0.0
        %1678 = vmatpush1.msra.mxu0 0.0
        %1679 = vmatprep.subr.mxu0 0.0
        %1680 = vmatpush1.msra.mxu0 0.0
        %1681 = vmatprep.subr.mxu0 0.0
        %1682 = vmatpush1.msra.mxu0 0.0
        %1683 = vmatprep.subr.mxu0 0.0
        %1684 = vmatpush1.msra.mxu0 0.0
        %1685 = vmatprep.subr.mxu0 0.0
        %1686 = vmatpush1.msra.mxu0 0.0
        %1687 = vmatprep.subr.mxu0 0.0
        %1688 = vmatpush1.msra.mxu0 0.0
        %1689 = vmatprep.subr.mxu0 0.0
        %1690 = vmatpush1.msra.mxu0 0.0
        %1691 = vmatprep.subr.mxu0 0.0
        %1692 = vmatpush1.msra.mxu0 0.0
        %1693 = vmatprep.subr.mxu0 0.0
        %1694 = vmatpush1.msra.mxu0 0.0
        %1695 = vmatprep.subr.mxu0 0.0
        %1696 = vmatpush1.msra.mxu0 0.0
        %1697 = vmatprep.subr.mxu0 0.0
        %1698 = vmatpush1.msra.mxu0 0.0
        %1699 = vmatprep.mubr.f32.mxu0 0.0
        %1700 = vmatmul.mubr.f32.gmra.mrb[0].mxu0 %v1556
        %v1701 = vpop.f32.mrb[0].mxu0
        %v1702 = vadd.f32 0.0, %v1701
        %v1703 = vpop.f32.mrb[0].mxu0
        %1704 = vdwg.mxu0
        %v1705 = vadd.f32 %v1532, %v1631
        %v1706 = vadd.f32 %v1533, %v1633
        %v1707 = vadd.f32 %v1534, %v1702
        %v1708 = vld [vmem:[%s2] sm:$0xff]
        %1710 = vset.pattern.permute.xlu0 0
        %1711 = vperm.xlu0 %1710, %v1708
        %v1712 = vpop.permute.xlu0 %1711
        %v1714 = vadd.f32 %v1705, %v1712
        %v1715 = vadd.f32 %v1706, %v1712
        %v1716 = vadd.f32 %v1707, %v1712
        %1717 = vst [vmem:[%s163] sm:$0xff] %v1714
        %1718 = vst [vmem:[%s163 + $0x8] sm:$0xff] %v1715
        %1719 = vst [vmem:[%s163 + $0x10] sm:$0xff] %v1716
        %s1720 = sand.u32 %s93, 1
        %s1721 = scalar_lea.sflag [#allocation3], %s1720
        %s1722 = sand.u32 %s93, 1
        %s1723 = smul.addr %s1722, 24
        %s1724 = scalar_lea.vmem [#allocation2], %s1723
        // Predicated region
        $region33: #{tpu_custom_call.1} parent=31 // pred_check
          %p1725 = pneg %p103
        $region34: #{tpu_custom_call.1} parent=31 // pred_check_branch
          %1727 = sbr.rel (%p1725) target = $region36
        $region35: #{tpu_custom_call.1} parent=31 // pred_region
          %s1729 = ssub.s32 384, 384
          %1730 = vsyncadd %s1721, %s1729
          %s1731 = smul.addr %s17, 3
          %s1732 = smul.addr %s1731, 128
          %s1733 = scalar_lea.hbm %s3, %s1732
          %s1735 = sshll.u32 %s1724, 4
          %s1736 = int_to_ptr.vmem [resolvable:$true] %s1735
          %1738 = dma.vmem_to_hbm [thread:$0]  %s1736, 384, %s1733, %s1721
        $region36: #{tpu_custom_call.1} parent=31 // pred_fallthru
          _
      $region32: #{tpu_custom_call.1} parent=5 // pred_fallthru
        _
      %p1739 = scmp.le.s32.totalorder 2, %s12
      // Predicated region
      $region37: #{tpu_custom_call.1} parent=5 // pred_check
        %p1740 = pneg %p1739
      $region38: #{tpu_custom_call.1} parent=5 // pred_check_branch
        %1742 = sbr.rel (%p1740) target = $region40
      $region39: #{tpu_custom_call.1} parent=5 // pred_region
        %s1743 = ssub.s32 %s12, 2
        // Predicated region
        $region41: #{tpu_custom_call.1} parent=39 // pred_check
          %p1744 = pneg %p109
        $region42: #{tpu_custom_call.1} parent=39 // pred_check_branch
          %1746 = sbr.rel (%p1744) target = $region44
        $region43: #{tpu_custom_call.1} parent=39 // pred_region
          %s1747 = sand.u32 %s94, 1
          %s1748 = scalar_lea.sflag [#allocation3], %s1747
          %s1749 = sand.u32 %s94, 1
          %s1750 = smul.addr %s1749, 24
          %s1751 = scalar_lea.vmem [#allocation2], %s1750
          %1752 = dma.done %s1748, 384
        $region44: #{tpu_custom_call.1} parent=39 // pred_fallthru
          _
      $region40: #{tpu_custom_call.1} parent=5 // pred_fallthru
        _
    $region6: #{tpu_custom_call.1} parent=1 // loop_footer
      %s16 = sadd.s32 1, %s12
    $region7: #{tpu_custom_call.1} parent=1 // loop_footer_branch
      %11 = sbr.rel target = $region3
    $region8: #{tpu_custom_call.1} parent=1 // loop_exit
      _
    %1753 = vsyncpa [#allocation3], 1
    %s1754 = scalar_lea.sflag [#allocation3], 1
    %1755 = vsyncpa %s1754, 1

</llo_original>
